<compile_context>
chip_gen: v5e
topology: v5e:2x2
jax: 0.10.0
libtpu: 0.0.40
codegen_flags: <defaults>
</compile_context>

<pallas_src>
import functools

import jax
import jax.numpy as jnp
from jax.experimental import pallas as pl
from jax.experimental.pallas import tpu as pltpu


def _round_up(x, m):
    return ((x + m - 1) // m) * m


# ---------------------------------------------------------------------------
# Fused kernel: unfold (im2col) + linear projection in one pass over HBM.
# ---------------------------------------------------------------------------
def _fused_patch_kernel(x_ref, w_ref, b_ref, o_ref, *, C, ph, pw, nw):
    """Processes one patch-row slab of a tile of frames.

    x_ref : [bt, C, ph, W]   raw frame rows i*ph .. (i+1)*ph, all channels
    w_ref : [K, N]           projection weight, K = C*ph*pw (nn.Unfold order)
    b_ref : [1, N]           bias (kept in f32)
    o_ref : [bt, 1, nw, N]   tokens for the nw patches of this patch-row
    """
    w = w_ref[...]
    b = b_ref[...]
    for j in range(nw):
        # Build nn.Unfold-ordered patch rows (channel-major, then row-in-patch,
        # then col-in-patch) directly in VMEM/vregs: no HBM im2col round trip.
        pieces = [
            x_ref[:, c, r, j * pw:(j + 1) * pw]
            for c in range(C) for r in range(ph)
        ]
        patch_rows = jnp.concatenate(pieces, axis=-1)              # [bt, K]
        acc = jnp.dot(patch_rows, w, preferred_element_type=jnp.float32)
        o_ref[:, 0, j, :] = (acc + b).astype(o_ref.dtype)          # f32 epilogue


def _fused_patch_embed(x_frames, weight_t, bias2d, *, patch_size, nh, nw):
    """x_frames: [BT, C, H, W] -> tokens [BT, nh, nw, N] (fused unfold+proj)."""
    BT, C, H, W = x_frames.shape
    K, N = weight_t.shape
    ph = pw = patch_size

    # Frame tile: keep one input slab around ~1 MiB so the double-buffered
    # working set stays far below v7x's 64 MiB physical / 32 MiB scoped VMEM.
    slab_bytes = C * ph * W * x_frames.dtype.itemsize
    bt_block = max(1, (1 << 20) // max(1, slab_bytes))
    if bt_block >= 8:
        bt_block = (bt_block // 8) * 8
    bt_block = min(bt_block, BT)

    kernel = functools.partial(_fused_patch_kernel, C=C, ph=ph, pw=pw, nw=nw)
    grid = (pl.cdiv(BT, bt_block), nh)

    return pl.pallas_call(
        kernel,
        out_shape=jax.ShapeDtypeStruct((BT, nh, nw, N), bias2d.dtype),
        grid_spec=pltpu.PrefetchScalarGridSpec(
            num_scalar_prefetch=0,
            grid=grid,
            in_specs=[
                # One patch-row slab of a tile of frames (block last-two dims:
                # ph is a multiple of 8, W is the full extent).
                pl.BlockSpec((bt_block, C, ph, W), lambda b, i: (b, 0, i, 0)),
                # Weight / bias stay resident (constant block index -> one DMA).
                pl.BlockSpec((K, N), lambda b, i: (0, 0)),
                pl.BlockSpec((1, N), lambda b, i: (0, 0)),
            ],
            out_specs=pl.BlockSpec((bt_block, 1, nw, N),
                                   lambda b, i: (b, i, 0, 0)),
        ),
        compiler_params=pltpu.CompilerParams(
            dimension_semantics=("parallel", "parallel")),
    )(x_frames, weight_t, bias2d)


# ---------------------------------------------------------------------------
# Fallback path: unfold in XLA (one HBM round trip) + large-tile Pallas GEMM.
# ---------------------------------------------------------------------------
def _proj_kernel(p_ref, w_ref, b_ref, o_ref):
    acc = jnp.dot(p_ref[...], w_ref[...], preferred_element_type=jnp.float32)
    o_ref[...] = (acc + b_ref[...]).astype(o_ref.dtype)


def _linear_pallas(patches, weight_t, bias2d, *, tm):
    """patches: [M, K], weight_t: [K, N], bias2d: [1, N] -> [M, N]."""
    M, K = patches.shape
    N = weight_t.shape[1]
    return pl.pallas_call(
        _proj_kernel,
        out_shape=jax.ShapeDtypeStruct((M, N), bias2d.dtype),
        grid_spec=pltpu.PrefetchScalarGridSpec(
            num_scalar_prefetch=0,
            grid=(pl.cdiv(M, tm),),
            in_specs=[
                pl.BlockSpec((tm, K), lambda i: (i, 0)),
                pl.BlockSpec((K, N), lambda i: (0, 0)),
                pl.BlockSpec((1, N), lambda i: (0, 0)),
            ],
            out_specs=pl.BlockSpec((tm, N), lambda i: (i, 0)),
        ),
        compiler_params=pltpu.CompilerParams(
            dimension_semantics=("parallel",)),
    )(patches, weight_t, bias2d)


def _unfused_patch_embed(x_frames, weight_t, bias2d, *, patch_size, nh, nw):
    """x_frames: [BT, C, H, W] -> tokens [BT, nh, nw, N] (unfold in XLA)."""
    BT, C, H, W = x_frames.shape
    ph = pw = patch_size
    xp = x_frames.reshape(BT, C, nh, ph, nw, pw)
    xp = jnp.transpose(xp, (0, 2, 4, 1, 3, 5))                  # nn.Unfold order
    patches = xp.reshape(BT * nh * nw, C * ph * pw)             # [M, K]
    M = patches.shape[0]
    # Large bounded row tile with a cdiv grid (partial last block is handled by
    # Pallas).  No tm = M fallback: the working set stays ~1 MiB regardless of M.
    tm = min(512, max(8, _round_up(M, 8)))
    tokens = _linear_pallas(patches, weight_t, bias2d, tm=tm)   # [M, N]
    return tokens.reshape(BT, nh, nw, weight_t.shape[1])


# ---------------------------------------------------------------------------
# Module-equivalent wrapper
# ---------------------------------------------------------------------------
class ViViTPatchEmbedPallas:
    def __init__(self, in_channels=3, patch_size=8, emb_dim=32,
                 image_size=(16, 16), key=None, compute_dtype=None):
        self.in_channels = in_channels
        self.patch_size = patch_size
        self.emb_dim = emb_dim
        self.image_size = image_size
        self.num_patches_h = image_size[0] // patch_size
        self.num_patches_w = image_size[1] // patch_size
        self.num_patches_per_frame = self.num_patches_h * self.num_patches_w
        self.patch_dim = patch_size * patch_size * in_channels
        # Optional bf16 path for the bandwidth-bound case (MXU accumulation and
        # the bias add stay f32).  None => keep parameter dtype (f32).
        self.compute_dtype = compute_dtype

        # Deterministic init matching nn.Linear's uniform(-1/sqrt(fan_in), ...).
        if key is None:
            key = jax.random.PRNGKey(0)
        kw, kb = jax.random.split(key)
        bound = 1.0 / (self.patch_dim ** 0.5)
        # PyTorch Linear layout: weight [emb_dim, patch_dim], bias [emb_dim].
        self.weight = jax.random.uniform(
            kw, (emb_dim, self.patch_dim), jnp.float32, -bound, bound)
        self.bias = jax.random.uniform(
            kb, (emb_dim,), jnp.float32, -bound, bound)

        # Precompute kernel-friendly parameter layouts ONCE (no per-call .T).
        self.weight_t = jnp.asarray(self.weight.T)               # [K, N]
        self.bias2d = self.bias.reshape(1, emb_dim)              # [1, N]
        self._w_kernel = (self.weight_t if compute_dtype is None
                          else self.weight_t.astype(compute_dtype))

        cfg = dict(patch_size=patch_size,
                   nh=self.num_patches_h, nw=self.num_patches_w)
        self._fused_fn = jax.jit(functools.partial(_fused_patch_embed, **cfg))
        self._unfused_fn = jax.jit(functools.partial(_unfused_patch_embed, **cfg))
        self._use_fused = None   # decided on first call

    # ----- helpers ---------------------------------------------------------
    def _kernel_args(self, x_frames):
        if self.compute_dtype is not None:
            x_frames = x_frames.astype(self.compute_dtype)
        return x_frames, self._w_kernel, self.bias2d

    def _jnp_reference(self, x_frames):
        """Pure-jnp reference, used only once to validate the fused path."""
        BT, C, H, W = x_frames.shape
        ph = pw = self.patch_size
        nh, nw = self.num_patches_h, self.num_patches_w
        xp = x_frames.reshape(BT, C, nh, ph, nw, pw)
        xp = jnp.transpose(xp, (0, 2, 4, 1, 3, 5))
        patches = xp.reshape(BT, nh * nw, C * ph * pw)
        tok = jnp.einsum("bpk,kn->bpn", patches, self.weight_t) + self.bias
        return tok.reshape(BT, nh, nw, self.emb_dim)

    def _select_path(self, x_frames):
        """Compile + numerically verify the fused kernel once; else fall back."""
        if self.patch_size % 8 != 0:
            # The fused input block's second-to-last dim (ph) must honor the
            # 8-row sublane tiling; otherwise use the GEMM fallback.
            self._use_fused = False
            return
        try:
            out = jax.block_until_ready(
                self._fused_fn(*self._kernel_args(x_frames)))
            ref = self._jnp_reference(x_frames)
            tol = 2e-2 if self.compute_dtype is not None else 1e-4
            self._use_fused = bool(jnp.allclose(
                out.astype(jnp.float32), ref, atol=tol, rtol=tol))
        except Exception:
            # Mosaic lowering not available for the fused rearrangement on this
            # jax/libtpu version -> use the proven tiled-GEMM path.
            self._use_fused = False

    # ----- forward ---------------------------------------------------------
    def __call__(self, x):
        """x: [B, T, C, H, W] -> [B, T * num_patches_per_frame, emb_dim]."""
        B, T, C, H, W = x.shape
        assert H == self.image_size[0] and W == self.image_size[1], \
            "Input image_size must match the predefined patch embedding size"
        x_frames = x.reshape(B * T, C, H, W)

        if self._use_fused is None:
            self._select_path(x_frames)

        fn = self._fused_fn if self._use_fused else self._unfused_fn
        tokens = fn(*self._kernel_args(x_frames))        # [BT, nh, nw, N]
        return tokens.reshape(B, T * self.num_patches_per_frame, self.emb_dim)


# ---------------------------------------------------------------------------
# Pure-JAX reference (in-script correctness check)
# ---------------------------------------------------------------------------
def _reference(module, x):
    B, T, C, H, W = x.shape
    ph = pw = module.patch_size
    nh, nw = module.num_patches_h, module.num_patches_w
    xb = x.reshape(B * T, C, nh, ph, nw, pw)
    xb = jnp.transpose(xb, (0, 2, 4, 1, 3, 5))
    patches = xb.reshape(B * T, nh * nw, C * ph * pw)
    tok = jnp.einsum("bpk,ek->bpe", patches, module.weight) + module.bias
    return tok.reshape(B, T * module.num_patches_per_frame, module.emb_dim)


if __name__ == "__main__":
    key = jax.random.PRNGKey(0)
    k_x, k_p = jax.random.split(key)

    # Small shapes consistent with the module's forward.
    B, T, C = 2, 2, 3
    patch_size = 8
    image_size = (16, 16)
    emb_dim = 32

    module = ViViTPatchEmbedPallas(
        in_channels=C, patch_size=patch_size, emb_dim=emb_dim,
        image_size=image_size, key=k_p)

    x = jax.random.normal(k_x, (B, T, C, *image_size), dtype=jnp.float32)

    out = jax.block_until_ready(module(x))

    expected_shape = (B, T * module.num_patches_per_frame, emb_dim)
    assert out.shape == expected_shape, (out.shape, expected_shape)

    ref = _reference(module, x)
    assert jnp.allclose(out, ref, atol=1e-4, rtol=1e-4), \
        float(jnp.max(jnp.abs(out - ref)))

    print("KERNEL_OK")
</pallas_src>

<mosaic_0001>
module attributes {stable_mosaic.version = 11 : i64} {
  func.func @_fused_patch_kernel(%arg0: i32, %arg1: i32, %arg2: memref<4x3x8x16xf32, #tpu.memory_space<vmem>>, %arg3: memref<192x32xf32, #tpu.memory_space<vmem>>, %arg4: memref<1x32xf32, #tpu.memory_space<vmem>>, %arg5: memref<4x1x2x32xf32, #tpu.memory_space<vmem>>) attributes {dimension_semantics = [#tpu.dimension_semantics<parallel>, #tpu.dimension_semantics<parallel>], iteration_bounds = array<i64: 1, 2>, scalar_prefetch = 0 : i64, scratch_operands = 0 : i64, tpu.core_type = #tpu.core_type<tc>, window_params = [{transform_indices = @transform_0, window_bounds = array<i64: 4, 3, 8, 16>}, {pipeline_mode = #tpu.pipeline_mode<synchronous>, transform_indices = @transform_1, window_bounds = array<i64: 192, 32>}, {pipeline_mode = #tpu.pipeline_mode<synchronous>, transform_indices = @transform_2, window_bounds = array<i64: 1, 32>}, {transform_indices = @transform_3, window_bounds = array<i64: 4, 1, 2, 32>}]} {
    %c0 = arith.constant 0 : index
    %c0_0 = arith.constant 0 : index
    %0 = vector.load %arg3[%c0, %c0_0] : memref<192x32xf32, #tpu.memory_space<vmem>>, vector<192x32xf32>
    %c0_1 = arith.constant 0 : index
    %c0_2 = arith.constant 0 : index
    %1 = vector.load %arg4[%c0_1, %c0_2] : memref<1x32xf32, #tpu.memory_space<vmem>>, vector<1x32xf32>
    %c0_3 = arith.constant 0 : index
    %c0_4 = arith.constant 0 : index
    %c0_5 = arith.constant 0 : index
    %c0_6 = arith.constant 0 : index
    %2 = vector.load %arg2[%c0_3, %c0_4, %c0_5, %c0_6] : memref<4x3x8x16xf32, #tpu.memory_space<vmem>>, vector<4x1x1x8xf32>
    %3 = vector.shape_cast %2 : vector<4x1x1x8xf32> to vector<4x8xf32>
    %c0_7 = arith.constant 0 : index
    %c0_8 = arith.constant 0 : index
    %c1 = arith.constant 1 : index
    %c0_9 = arith.constant 0 : index
    %4 = vector.load %arg2[%c0_7, %c0_8, %c1, %c0_9] : memref<4x3x8x16xf32, #tpu.memory_space<vmem>>, vector<4x1x1x8xf32>
    %5 = vector.shape_cast %4 : vector<4x1x1x8xf32> to vector<4x8xf32>
    %c0_10 = arith.constant 0 : index
    %c0_11 = arith.constant 0 : index
    %c2 = arith.constant 2 : index
    %c0_12 = arith.constant 0 : index
    %6 = vector.load %arg2[%c0_10, %c0_11, %c2, %c0_12] : memref<4x3x8x16xf32, #tpu.memory_space<vmem>>, vector<4x1x1x8xf32>
    %7 = vector.shape_cast %6 : vector<4x1x1x8xf32> to vector<4x8xf32>
    %c0_13 = arith.constant 0 : index
    %c0_14 = arith.constant 0 : index
    %c3 = arith.constant 3 : index
    %c0_15 = arith.constant 0 : index
    %8 = vector.load %arg2[%c0_13, %c0_14, %c3, %c0_15] : memref<4x3x8x16xf32, #tpu.memory_space<vmem>>, vector<4x1x1x8xf32>
    %9 = vector.shape_cast %8 : vector<4x1x1x8xf32> to vector<4x8xf32>
    %c0_16 = arith.constant 0 : index
    %c0_17 = arith.constant 0 : index
    %c4 = arith.constant 4 : index
    %c0_18 = arith.constant 0 : index
    %10 = vector.load %arg2[%c0_16, %c0_17, %c4, %c0_18] : memref<4x3x8x16xf32, #tpu.memory_space<vmem>>, vector<4x1x1x8xf32>
    %11 = vector.shape_cast %10 : vector<4x1x1x8xf32> to vector<4x8xf32>
    %c0_19 = arith.constant 0 : index
    %c0_20 = arith.constant 0 : index
    %c5 = arith.constant 5 : index
    %c0_21 = arith.constant 0 : index
    %12 = vector.load %arg2[%c0_19, %c0_20, %c5, %c0_21] : memref<4x3x8x16xf32, #tpu.memory_space<vmem>>, vector<4x1x1x8xf32>
    %13 = vector.shape_cast %12 : vector<4x1x1x8xf32> to vector<4x8xf32>
    %c0_22 = arith.constant 0 : index
    %c0_23 = arith.constant 0 : index
    %c6 = arith.constant 6 : index
    %c0_24 = arith.constant 0 : index
    %14 = vector.load %arg2[%c0_22, %c0_23, %c6, %c0_24] : memref<4x3x8x16xf32, #tpu.memory_space<vmem>>, vector<4x1x1x8xf32>
    %15 = vector.shape_cast %14 : vector<4x1x1x8xf32> to vector<4x8xf32>
    %c0_25 = arith.constant 0 : index
    %c0_26 = arith.constant 0 : index
    %c7 = arith.constant 7 : index
    %c0_27 = arith.constant 0 : index
    %16 = vector.load %arg2[%c0_25, %c0_26, %c7, %c0_27] : memref<4x3x8x16xf32, #tpu.memory_space<vmem>>, vector<4x1x1x8xf32>
    %17 = vector.shape_cast %16 : vector<4x1x1x8xf32> to vector<4x8xf32>
    %c0_28 = arith.constant 0 : index
    %c1_29 = arith.constant 1 : index
    %c0_30 = arith.constant 0 : index
    %c0_31 = arith.constant 0 : index
    %18 = vector.load %arg2[%c0_28, %c1_29, %c0_30, %c0_31] : memref<4x3x8x16xf32, #tpu.memory_space<vmem>>, vector<4x1x1x8xf32>
    %19 = vector.shape_cast %18 : vector<4x1x1x8xf32> to vector<4x8xf32>
    %c0_32 = arith.constant 0 : index
    %c1_33 = arith.constant 1 : index
    %c1_34 = arith.constant 1 : index
    %c0_35 = arith.constant 0 : index
    %20 = vector.load %arg2[%c0_32, %c1_33, %c1_34, %c0_35] : memref<4x3x8x16xf32, #tpu.memory_space<vmem>>, vector<4x1x1x8xf32>
    %21 = vector.shape_cast %20 : vector<4x1x1x8xf32> to vector<4x8xf32>
    %c0_36 = arith.constant 0 : index
    %c1_37 = arith.constant 1 : index
    %c2_38 = arith.constant 2 : index
    %c0_39 = arith.constant 0 : index
    %22 = vector.load %arg2[%c0_36, %c1_37, %c2_38, %c0_39] : memref<4x3x8x16xf32, #tpu.memory_space<vmem>>, vector<4x1x1x8xf32>
    %23 = vector.shape_cast %22 : vector<4x1x1x8xf32> to vector<4x8xf32>
    %c0_40 = arith.constant 0 : index
    %c1_41 = arith.constant 1 : index
    %c3_42 = arith.constant 3 : index
    %c0_43 = arith.constant 0 : index
    %24 = vector.load %arg2[%c0_40, %c1_41, %c3_42, %c0_43] : memref<4x3x8x16xf32, #tpu.memory_space<vmem>>, vector<4x1x1x8xf32>
    %25 = vector.shape_cast %24 : vector<4x1x1x8xf32> to vector<4x8xf32>
    %c0_44 = arith.constant 0 : index
    %c1_45 = arith.constant 1 : index
    %c4_46 = arith.constant 4 : index
    %c0_47 = arith.constant 0 : index
    %26 = vector.load %arg2[%c0_44, %c1_45, %c4_46, %c0_47] : memref<4x3x8x16xf32, #tpu.memory_space<vmem>>, vector<4x1x1x8xf32>
    %27 = vector.shape_cast %26 : vector<4x1x1x8xf32> to vector<4x8xf32>
    %c0_48 = arith.constant 0 : index
    %c1_49 = arith.constant 1 : index
    %c5_50 = arith.constant 5 : index
    %c0_51 = arith.constant 0 : index
    %28 = vector.load %arg2[%c0_48, %c1_49, %c5_50, %c0_51] : memref<4x3x8x16xf32, #tpu.memory_space<vmem>>, vector<4x1x1x8xf32>
    %29 = vector.shape_cast %28 : vector<4x1x1x8xf32> to vector<4x8xf32>
    %c0_52 = arith.constant 0 : index
    %c1_53 = arith.constant 1 : index
    %c6_54 = arith.constant 6 : index
    %c0_55 = arith.constant 0 : index
    %30 = vector.load %arg2[%c0_52, %c1_53, %c6_54, %c0_55] : memref<4x3x8x16xf32, #tpu.memory_space<vmem>>, vector<4x1x1x8xf32>
    %31 = vector.shape_cast %30 : vector<4x1x1x8xf32> to vector<4x8xf32>
    %c0_56 = arith.constant 0 : index
    %c1_57 = arith.constant 1 : index
    %c7_58 = arith.constant 7 : index
    %c0_59 = arith.constant 0 : index
    %32 = vector.load %arg2[%c0_56, %c1_57, %c7_58, %c0_59] : memref<4x3x8x16xf32, #tpu.memory_space<vmem>>, vector<4x1x1x8xf32>
    %33 = vector.shape_cast %32 : vector<4x1x1x8xf32> to vector<4x8xf32>
    %c0_60 = arith.constant 0 : index
    %c2_61 = arith.constant 2 : index
    %c0_62 = arith.constant 0 : index
    %c0_63 = arith.constant 0 : index
    %34 = vector.load %arg2[%c0_60, %c2_61, %c0_62, %c0_63] : memref<4x3x8x16xf32, #tpu.memory_space<vmem>>, vector<4x1x1x8xf32>
    %35 = vector.shape_cast %34 : vector<4x1x1x8xf32> to vector<4x8xf32>
    %c0_64 = arith.constant 0 : index
    %c2_65 = arith.constant 2 : index
    %c1_66 = arith.constant 1 : index
    %c0_67 = arith.constant 0 : index
    %36 = vector.load %arg2[%c0_64, %c2_65, %c1_66, %c0_67] : memref<4x3x8x16xf32, #tpu.memory_space<vmem>>, vector<4x1x1x8xf32>
    %37 = vector.shape_cast %36 : vector<4x1x1x8xf32> to vector<4x8xf32>
    %c0_68 = arith.constant 0 : index
    %c2_69 = arith.constant 2 : index
    %c2_70 = arith.constant 2 : index
    %c0_71 = arith.constant 0 : index
    %38 = vector.load %arg2[%c0_68, %c2_69, %c2_70, %c0_71] : memref<4x3x8x16xf32, #tpu.memory_space<vmem>>, vector<4x1x1x8xf32>
    %39 = vector.shape_cast %38 : vector<4x1x1x8xf32> to vector<4x8xf32>
    %c0_72 = arith.constant 0 : index
    %c2_73 = arith.constant 2 : index
    %c3_74 = arith.constant 3 : index
    %c0_75 = arith.constant 0 : index
    %40 = vector.load %arg2[%c0_72, %c2_73, %c3_74, %c0_75] : memref<4x3x8x16xf32, #tpu.memory_space<vmem>>, vector<4x1x1x8xf32>
    %41 = vector.shape_cast %40 : vector<4x1x1x8xf32> to vector<4x8xf32>
    %c0_76 = arith.constant 0 : index
    %c2_77 = arith.constant 2 : index
    %c4_78 = arith.constant 4 : index
    %c0_79 = arith.constant 0 : index
    %42 = vector.load %arg2[%c0_76, %c2_77, %c4_78, %c0_79] : memref<4x3x8x16xf32, #tpu.memory_space<vmem>>, vector<4x1x1x8xf32>
    %43 = vector.shape_cast %42 : vector<4x1x1x8xf32> to vector<4x8xf32>
    %c0_80 = arith.constant 0 : index
    %c2_81 = arith.constant 2 : index
    %c5_82 = arith.constant 5 : index
    %c0_83 = arith.constant 0 : index
    %44 = vector.load %arg2[%c0_80, %c2_81, %c5_82, %c0_83] : memref<4x3x8x16xf32, #tpu.memory_space<vmem>>, vector<4x1x1x8xf32>
    %45 = vector.shape_cast %44 : vector<4x1x1x8xf32> to vector<4x8xf32>
    %c0_84 = arith.constant 0 : index
    %c2_85 = arith.constant 2 : index
    %c6_86 = arith.constant 6 : index
    %c0_87 = arith.constant 0 : index
    %46 = vector.load %arg2[%c0_84, %c2_85, %c6_86, %c0_87] : memref<4x3x8x16xf32, #tpu.memory_space<vmem>>, vector<4x1x1x8xf32>
    %47 = vector.shape_cast %46 : vector<4x1x1x8xf32> to vector<4x8xf32>
    %c0_88 = arith.constant 0 : index
    %c2_89 = arith.constant 2 : index
    %c7_90 = arith.constant 7 : index
    %c0_91 = arith.constant 0 : index
    %48 = vector.load %arg2[%c0_88, %c2_89, %c7_90, %c0_91] : memref<4x3x8x16xf32, #tpu.memory_space<vmem>>, vector<4x1x1x8xf32>
    %49 = vector.shape_cast %48 : vector<4x1x1x8xf32> to vector<4x8xf32>
    %50 = tpu.concatenate %3, %5, %7, %9, %11, %13, %15, %17, %19, %21, %23, %25, %27, %29, %31, %33 in 1 : vector<4x8xf32>, vector<4x8xf32>, vector<4x8xf32>, vector<4x8xf32>, vector<4x8xf32>, vector<4x8xf32>, vector<4x8xf32>, vector<4x8xf32>, vector<4x8xf32>, vector<4x8xf32>, vector<4x8xf32>, vector<4x8xf32>, vector<4x8xf32>, vector<4x8xf32>, vector<4x8xf32>, vector<4x8xf32> -> vector<4x128xf32>
    %51 = tpu.concatenate %35, %37, %39, %41, %43, %45, %47, %49 in 1 : vector<4x8xf32>, vector<4x8xf32>, vector<4x8xf32>, vector<4x8xf32>, vector<4x8xf32>, vector<4x8xf32>, vector<4x8xf32>, vector<4x8xf32> -> vector<4x64xf32>
    %52 = tpu.concatenate %50, %51 in 1 : vector<4x128xf32>, vector<4x64xf32> -> vector<4x192xf32>
    %cst = arith.constant dense<0.000000e+00> : vector<4x32xf32>
    %53 = tpu.matmul %52, %0, %cst {dimension_numbers = #tpu.dot_dimension_numbers<[1], [0], [0], [1], [0, 0, 1, 1], [], []>} : vector<4x192xf32>, vector<192x32xf32>, vector<4x32xf32> -> vector<4x32xf32>
    %54 = vector.broadcast %1 : vector<1x32xf32> to vector<4x32xf32>
    %55 = arith.addf %53, %54 : vector<4x32xf32>
    %c0_92 = arith.constant 0 : index
    %c0_93 = arith.constant 0 : index
    %c0_94 = arith.constant 0 : index
    %c0_95 = arith.constant 0 : index
    %56 = vector.load %arg5[%c0_92, %c0_93, %c0_94, %c0_95] : memref<4x1x2x32xf32, #tpu.memory_space<vmem>>, vector<4x1x1x32xf32>
    %57 = vector.shape_cast %56 : vector<4x1x1x32xf32> to vector<4x32xf32>
    %58 = vector.shape_cast %55 : vector<4x32xf32> to vector<4x1x1x32xf32>
    tpu.vector_store %arg5[%c0_92, %c0_93, %c0_94, %c0_95], %58 {strides = array<i32>} : memref<4x1x2x32xf32, #tpu.memory_space<vmem>>, vector<4x1x1x32xf32>,
    %c0_96 = arith.constant 0 : index
    %c0_97 = arith.constant 0 : index
    %c0_98 = arith.constant 0 : index
    %c8 = arith.constant 8 : index
    %59 = vector.load %arg2[%c0_96, %c0_97, %c0_98, %c8] : memref<4x3x8x16xf32, #tpu.memory_space<vmem>>, vector<4x1x1x8xf32>
    %60 = vector.shape_cast %59 : vector<4x1x1x8xf32> to vector<4x8xf32>
    %c0_99 = arith.constant 0 : index
    %c0_100 = arith.constant 0 : index
    %c1_101 = arith.constant 1 : index
    %c8_102 = arith.constant 8 : index
    %61 = vector.load %arg2[%c0_99, %c0_100, %c1_101, %c8_102] : memref<4x3x8x16xf32, #tpu.memory_space<vmem>>, vector<4x1x1x8xf32>
    %62 = vector.shape_cast %61 : vector<4x1x1x8xf32> to vector<4x8xf32>
    %c0_103 = arith.constant 0 : index
    %c0_104 = arith.constant 0 : index
    %c2_105 = arith.constant 2 : index
    %c8_106 = arith.constant 8 : index
    %63 = vector.load %arg2[%c0_103, %c0_104, %c2_105, %c8_106] : memref<4x3x8x16xf32, #tpu.memory_space<vmem>>, vector<4x1x1x8xf32>
    %64 = vector.shape_cast %63 : vector<4x1x1x8xf32> to vector<4x8xf32>
    %c0_107 = arith.constant 0 : index
    %c0_108 = arith.constant 0 : index
    %c3_109 = arith.constant 3 : index
    %c8_110 = arith.constant 8 : index
    %65 = vector.load %arg2[%c0_107, %c0_108, %c3_109, %c8_110] : memref<4x3x8x16xf32, #tpu.memory_space<vmem>>, vector<4x1x1x8xf32>
    %66 = vector.shape_cast %65 : vector<4x1x1x8xf32> to vector<4x8xf32>
    %c0_111 = arith.constant 0 : index
    %c0_112 = arith.constant 0 : index
    %c4_113 = arith.constant 4 : index
    %c8_114 = arith.constant 8 : index
    %67 = vector.load %arg2[%c0_111, %c0_112, %c4_113, %c8_114] : memref<4x3x8x16xf32, #tpu.memory_space<vmem>>, vector<4x1x1x8xf32>
    %68 = vector.shape_cast %67 : vector<4x1x1x8xf32> to vector<4x8xf32>
    %c0_115 = arith.constant 0 : index
    %c0_116 = arith.constant 0 : index
    %c5_117 = arith.constant 5 : index
    %c8_118 = arith.constant 8 : index
    %69 = vector.load %arg2[%c0_115, %c0_116, %c5_117, %c8_118] : memref<4x3x8x16xf32, #tpu.memory_space<vmem>>, vector<4x1x1x8xf32>
    %70 = vector.shape_cast %69 : vector<4x1x1x8xf32> to vector<4x8xf32>
    %c0_119 = arith.constant 0 : index
    %c0_120 = arith.constant 0 : index
    %c6_121 = arith.constant 6 : index
    %c8_122 = arith.constant 8 : index
    %71 = vector.load %arg2[%c0_119, %c0_120, %c6_121, %c8_122] : memref<4x3x8x16xf32, #tpu.memory_space<vmem>>, vector<4x1x1x8xf32>
    %72 = vector.shape_cast %71 : vector<4x1x1x8xf32> to vector<4x8xf32>
    %c0_123 = arith.constant 0 : index
    %c0_124 = arith.constant 0 : index
    %c7_125 = arith.constant 7 : index
    %c8_126 = arith.constant 8 : index
    %73 = vector.load %arg2[%c0_123, %c0_124, %c7_125, %c8_126] : memref<4x3x8x16xf32, #tpu.memory_space<vmem>>, vector<4x1x1x8xf32>
    %74 = vector.shape_cast %73 : vector<4x1x1x8xf32> to vector<4x8xf32>
    %c0_127 = arith.constant 0 : index
    %c1_128 = arith.constant 1 : index
    %c0_129 = arith.constant 0 : index
    %c8_130 = arith.constant 8 : index
    %75 = vector.load %arg2[%c0_127, %c1_128, %c0_129, %c8_130] : memref<4x3x8x16xf32, #tpu.memory_space<vmem>>, vector<4x1x1x8xf32>
    %76 = vector.shape_cast %75 : vector<4x1x1x8xf32> to vector<4x8xf32>
    %c0_131 = arith.constant 0 : index
    %c1_132 = arith.constant 1 : index
    %c1_133 = arith.constant 1 : index
    %c8_134 = arith.constant 8 : index
    %77 = vector.load %arg2[%c0_131, %c1_132, %c1_133, %c8_134] : memref<4x3x8x16xf32, #tpu.memory_space<vmem>>, vector<4x1x1x8xf32>
    %78 = vector.shape_cast %77 : vector<4x1x1x8xf32> to vector<4x8xf32>
    %c0_135 = arith.constant 0 : index
    %c1_136 = arith.constant 1 : index
    %c2_137 = arith.constant 2 : index
    %c8_138 = arith.constant 8 : index
    %79 = vector.load %arg2[%c0_135, %c1_136, %c2_137, %c8_138] : memref<4x3x8x16xf32, #tpu.memory_space<vmem>>, vector<4x1x1x8xf32>
    %80 = vector.shape_cast %79 : vector<4x1x1x8xf32> to vector<4x8xf32>
    %c0_139 = arith.constant 0 : index
    %c1_140 = arith.constant 1 : index
    %c3_141 = arith.constant 3 : index
    %c8_142 = arith.constant 8 : index
    %81 = vector.load %arg2[%c0_139, %c1_140, %c3_141, %c8_142] : memref<4x3x8x16xf32, #tpu.memory_space<vmem>>, vector<4x1x1x8xf32>
    %82 = vector.shape_cast %81 : vector<4x1x1x8xf32> to vector<4x8xf32>
    %c0_143 = arith.constant 0 : index
    %c1_144 = arith.constant 1 : index
    %c4_145 = arith.constant 4 : index
    %c8_146 = arith.constant 8 : index
    %83 = vector.load %arg2[%c0_143, %c1_144, %c4_145, %c8_146] : memref<4x3x8x16xf32, #tpu.memory_space<vmem>>, vector<4x1x1x8xf32>
    %84 = vector.shape_cast %83 : vector<4x1x1x8xf32> to vector<4x8xf32>
    %c0_147 = arith.constant 0 : index
    %c1_148 = arith.constant 1 : index
    %c5_149 = arith.constant 5 : index
    %c8_150 = arith.constant 8 : index
    %85 = vector.load %arg2[%c0_147, %c1_148, %c5_149, %c8_150] : memref<4x3x8x16xf32, #tpu.memory_space<vmem>>, vector<4x1x1x8xf32>
    %86 = vector.shape_cast %85 : vector<4x1x1x8xf32> to vector<4x8xf32>
    %c0_151 = arith.constant 0 : index
    %c1_152 = arith.constant 1 : index
    %c6_153 = arith.constant 6 : index
    %c8_154 = arith.constant 8 : index
    %87 = vector.load %arg2[%c0_151, %c1_152, %c6_153, %c8_154] : memref<4x3x8x16xf32, #tpu.memory_space<vmem>>, vector<4x1x1x8xf32>
    %88 = vector.shape_cast %87 : vector<4x1x1x8xf32> to vector<4x8xf32>
    %c0_155 = arith.constant 0 : index
    %c1_156 = arith.constant 1 : index
    %c7_157 = arith.constant 7 : index
    %c8_158 = arith.constant 8 : index
    %89 = vector.load %arg2[%c0_155, %c1_156, %c7_157, %c8_158] : memref<4x3x8x16xf32, #tpu.memory_space<vmem>>, vector<4x1x1x8xf32>
    %90 = vector.shape_cast %89 : vector<4x1x1x8xf32> to vector<4x8xf32>
    %c0_159 = arith.constant 0 : index
    %c2_160 = arith.constant 2 : index
    %c0_161 = arith.constant 0 : index
    %c8_162 = arith.constant 8 : index
    %91 = vector.load %arg2[%c0_159, %c2_160, %c0_161, %c8_162] : memref<4x3x8x16xf32, #tpu.memory_space<vmem>>, vector<4x1x1x8xf32>
    %92 = vector.shape_cast %91 : vector<4x1x1x8xf32> to vector<4x8xf32>
    %c0_163 = arith.constant 0 : index
    %c2_164 = arith.constant 2 : index
    %c1_165 = arith.constant 1 : index
    %c8_166 = arith.constant 8 : index
    %93 = vector.load %arg2[%c0_163, %c2_164, %c1_165, %c8_166] : memref<4x3x8x16xf32, #tpu.memory_space<vmem>>, vector<4x1x1x8xf32>
    %94 = vector.shape_cast %93 : vector<4x1x1x8xf32> to vector<4x8xf32>
    %c0_167 = arith.constant 0 : index
    %c2_168 = arith.constant 2 : index
    %c2_169 = arith.constant 2 : index
    %c8_170 = arith.constant 8 : index
    %95 = vector.load %arg2[%c0_167, %c2_168, %c2_169, %c8_170] : memref<4x3x8x16xf32, #tpu.memory_space<vmem>>, vector<4x1x1x8xf32>
    %96 = vector.shape_cast %95 : vector<4x1x1x8xf32> to vector<4x8xf32>
    %c0_171 = arith.constant 0 : index
    %c2_172 = arith.constant 2 : index
    %c3_173 = arith.constant 3 : index
    %c8_174 = arith.constant 8 : index
    %97 = vector.load %arg2[%c0_171, %c2_172, %c3_173, %c8_174] : memref<4x3x8x16xf32, #tpu.memory_space<vmem>>, vector<4x1x1x8xf32>
    %98 = vector.shape_cast %97 : vector<4x1x1x8xf32> to vector<4x8xf32>
    %c0_175 = arith.constant 0 : index
    %c2_176 = arith.constant 2 : index
    %c4_177 = arith.constant 4 : index
    %c8_178 = arith.constant 8 : index
    %99 = vector.load %arg2[%c0_175, %c2_176, %c4_177, %c8_178] : memref<4x3x8x16xf32, #tpu.memory_space<vmem>>, vector<4x1x1x8xf32>
    %100 = vector.shape_cast %99 : vector<4x1x1x8xf32> to vector<4x8xf32>
    %c0_179 = arith.constant 0 : index
    %c2_180 = arith.constant 2 : index
    %c5_181 = arith.constant 5 : index
    %c8_182 = arith.constant 8 : index
    %101 = vector.load %arg2[%c0_179, %c2_180, %c5_181, %c8_182] : memref<4x3x8x16xf32, #tpu.memory_space<vmem>>, vector<4x1x1x8xf32>
    %102 = vector.shape_cast %101 : vector<4x1x1x8xf32> to vector<4x8xf32>
    %c0_183 = arith.constant 0 : index
    %c2_184 = arith.constant 2 : index
    %c6_185 = arith.constant 6 : index
    %c8_186 = arith.constant 8 : index
    %103 = vector.load %arg2[%c0_183, %c2_184, %c6_185, %c8_186] : memref<4x3x8x16xf32, #tpu.memory_space<vmem>>, vector<4x1x1x8xf32>
    %104 = vector.shape_cast %103 : vector<4x1x1x8xf32> to vector<4x8xf32>
    %c0_187 = arith.constant 0 : index
    %c2_188 = arith.constant 2 : index
    %c7_189 = arith.constant 7 : index
    %c8_190 = arith.constant 8 : index
    %105 = vector.load %arg2[%c0_187, %c2_188, %c7_189, %c8_190] : memref<4x3x8x16xf32, #tpu.memory_space<vmem>>, vector<4x1x1x8xf32>
    %106 = vector.shape_cast %105 : vector<4x1x1x8xf32> to vector<4x8xf32>
    %107 = tpu.concatenate %60, %62, %64, %66, %68, %70, %72, %74, %76, %78, %80, %82, %84, %86, %88, %90 in 1 : vector<4x8xf32>, vector<4x8xf32>, vector<4x8xf32>, vector<4x8xf32>, vector<4x8xf32>, vector<4x8xf32>, vector<4x8xf32>, vector<4x8xf32>, vector<4x8xf32>, vector<4x8xf32>, vector<4x8xf32>, vector<4x8xf32>, vector<4x8xf32>, vector<4x8xf32>, vector<4x8xf32>, vector<4x8xf32> -> vector<4x128xf32>
    %108 = tpu.concatenate %92, %94, %96, %98, %100, %102, %104, %106 in 1 : vector<4x8xf32>, vector<4x8xf32>, vector<4x8xf32>, vector<4x8xf32>, vector<4x8xf32>, vector<4x8xf32>, vector<4x8xf32>, vector<4x8xf32> -> vector<4x64xf32>
    %109 = tpu.concatenate %107, %108 in 1 : vector<4x128xf32>, vector<4x64xf32> -> vector<4x192xf32>
    %cst_191 = arith.constant dense<0.000000e+00> : vector<4x32xf32>
    %110 = tpu.matmul %109, %0, %cst_191 {dimension_numbers = #tpu.dot_dimension_numbers<[1], [0], [0], [1], [0, 0, 1, 1], [], []>} : vector<4x192xf32>, vector<192x32xf32>, vector<4x32xf32> -> vector<4x32xf32>
    %111 = vector.broadcast %1 : vector<1x32xf32> to vector<4x32xf32>
    %112 = arith.addf %110, %111 : vector<4x32xf32>
    %c0_192 = arith.constant 0 : index
    %c0_193 = arith.constant 0 : index
    %c1_194 = arith.constant 1 : index
    %c0_195 = arith.constant 0 : index
    %113 = vector.load %arg5[%c0_192, %c0_193, %c1_194, %c0_195] : memref<4x1x2x32xf32, #tpu.memory_space<vmem>>, vector<4x1x1x32xf32>
    %114 = vector.shape_cast %113 : vector<4x1x1x32xf32> to vector<4x32xf32>
    %115 = vector.shape_cast %112 : vector<4x32xf32> to vector<4x1x1x32xf32>
    tpu.vector_store %arg5[%c0_192, %c0_193, %c1_194, %c0_195], %115 {strides = array<i32>} : memref<4x1x2x32xf32, #tpu.memory_space<vmem>>, vector<4x1x1x32xf32>,
    return
  }
  func.func @transform_0(%arg0: i32, %arg1: i32) -> (i32, i32, i32, i32) {
    %c0_i32 = arith.constant 0 : i32
    %c0_i32_0 = arith.constant 0 : i32
    %c0_i32_1 = arith.constant 0 : i32
    return %arg0, %c0_i32, %arg1, %c0_i32_0 : i32, i32, i32, i32
  }
  func.func @transform_1(%arg0: i32, %arg1: i32) -> (i32, i32) {
    %c0_i32 = arith.constant 0 : i32
    %c0_i32_0 = arith.constant 0 : i32
    %c0_i32_1 = arith.constant 0 : i32
    return %c0_i32, %c0_i32_0 : i32, i32
  }
  func.func @transform_2(%arg0: i32, %arg1: i32) -> (i32, i32) {
    %c0_i32 = arith.constant 0 : i32
    %c0_i32_0 = arith.constant 0 : i32
    %c0_i32_1 = arith.constant 0 : i32
    return %c0_i32, %c0_i32_0 : i32, i32
  }
  func.func @transform_3(%arg0: i32, %arg1: i32) -> (i32, i32, i32, i32) {
    %c0_i32 = arith.constant 0 : i32
    %c0_i32_0 = arith.constant 0 : i32
    %c0_i32_1 = arith.constant 0 : i32
    return %arg0, %arg1, %c0_i32, %c0_i32_0 : i32, i32, i32, i32
  }
}

module attributes {stable_mosaic.version = 11 : i64} {
  func.func @_proj_kernel(%arg0: i32, %arg1: memref<16x192xf32, #tpu.memory_space<vmem>>, %arg2: memref<192x32xf32, #tpu.memory_space<vmem>>, %arg3: memref<1x32xf32, #tpu.memory_space<vmem>>, %arg4: memref<16x32xf32, #tpu.memory_space<vmem>>) attributes {dimension_semantics = [#tpu.dimension_semantics<parallel>], iteration_bounds = array<i64: 1>, scalar_prefetch = 0 : i64, scratch_operands = 0 : i64, tpu.core_type = #tpu.core_type<tc>, window_params = [{transform_indices = @transform_0, window_bounds = array<i64: 16, 192>}, {pipeline_mode = #tpu.pipeline_mode<synchronous>, transform_indices = @transform_1, window_bounds = array<i64: 192, 32>}, {pipeline_mode = #tpu.pipeline_mode<synchronous>, transform_indices = @transform_2, window_bounds = array<i64: 1, 32>}, {transform_indices = @transform_3, window_bounds = array<i64: 16, 32>}]} {
    %c0 = arith.constant 0 : index
    %c0_0 = arith.constant 0 : index
    %0 = vector.load %arg1[%c0, %c0_0] : memref<16x192xf32, #tpu.memory_space<vmem>>, vector<16x192xf32>
    %c0_1 = arith.constant 0 : index
    %c0_2 = arith.constant 0 : index
    %1 = vector.load %arg2[%c0_1, %c0_2] : memref<192x32xf32, #tpu.memory_space<vmem>>, vector<192x32xf32>
    %cst = arith.constant dense<0.000000e+00> : vector<16x32xf32>
    %2 = tpu.matmul %0, %1, %cst {dimension_numbers = #tpu.dot_dimension_numbers<[1], [0], [0], [1], [0, 0, 1, 1], [], []>} : vector<16x192xf32>, vector<192x32xf32>, vector<16x32xf32> -> vector<16x32xf32>
    %c0_3 = arith.constant 0 : index
    %c0_4 = arith.constant 0 : index
    %3 = vector.load %arg3[%c0_3, %c0_4] : memref<1x32xf32, #tpu.memory_space<vmem>>, vector<1x32xf32>
    %4 = vector.broadcast %3 : vector<1x32xf32> to vector<16x32xf32>
    %5 = arith.addf %2, %4 : vector<16x32xf32>
    %c0_5 = arith.constant 0 : index
    %c0_6 = arith.constant 0 : index
    %6 = vector.load %arg4[%c0_5, %c0_6] : memref<16x32xf32, #tpu.memory_space<vmem>>, vector<16x32xf32>
    tpu.vector_store %arg4[%c0_5, %c0_6], %5 {strides = array<i32>} : memref<16x32xf32, #tpu.memory_space<vmem>>, vector<16x32xf32>,
    return
  }
  func.func @transform_0(%arg0: i32) -> (i32, i32) {
    %c0_i32 = arith.constant 0 : i32
    %c0_i32_0 = arith.constant 0 : i32
    return %arg0, %c0_i32 : i32, i32
  }
  func.func @transform_1(%arg0: i32) -> (i32, i32) {
    %c0_i32 = arith.constant 0 : i32
    %c0_i32_0 = arith.constant 0 : i32
    %c0_i32_1 = arith.constant 0 : i32
    return %c0_i32, %c0_i32_0 : i32, i32
  }
  func.func @transform_2(%arg0: i32) -> (i32, i32) {
    %c0_i32 = arith.constant 0 : i32
    %c0_i32_0 = arith.constant 0 : i32
    %c0_i32_1 = arith.constant 0 : i32
    return %c0_i32, %c0_i32_0 : i32, i32
  }
  func.func @transform_3(%arg0: i32) -> (i32, i32) {
    %c0_i32 = arith.constant 0 : i32
    %c0_i32_0 = arith.constant 0 : i32
    return %arg0, %c0_i32 : i32, i32
  }
}

</mosaic_0001>

<llo_original>
// kernel: _fused_patch_embed.1
$region0: #{_fused_patch_embed.1}
  #allocation0 [shape = 'u32[]', space=smem, size = 0x4, offset = 0x4, fixed_abs, tag = 'smem constant byte address 0x4 - core index']
  #allocation1 [shape = 'u32[72,128]{1,0:T(1,128)}', space=vmem, size = 0x9000, scoped, tag = 'internal scratch']
  %s0 = inlined_call_operand.vmem [shape: f32[4,3,16,16], index: 0, kind: input, shape index: {}]
  %s1 = inlined_call_operand.vmem [shape: f32[192,32], index: 1, kind: input, shape index: {}]
  %s2 = inlined_call_operand.vmem [shape: f32[1,32], index: 2, kind: input, shape index: {}]
  %s3 = inlined_call_operand.hbm [shape: f32[4,2,2,32], index: 3, kind: output, shape index: {}]
  %s4 = sld [smem:[#allocation0]]
  $region83: #{_fused_patch_embed.1} parent=0
    _
  %s6 = ssub.s32 1, %s4
  %s7 = scalar_select 0, %s6, %s4
  $region1: #{_fused_patch_embed.1} parent=0
    #allocation2 [shape = 'u8[98304]{0}', space=vmem, size = 0x18000, scoped, tag = 'input window, operand 0']
    #allocation3 [shape = 'u8[8192]{0}', space=vmem, size = 0x2000, scoped, tag = 'output window, operand 0']
    #allocation4 [shape = 's32[2]{0}', space=sflag, size = 0x8, scoped, tag = 'scoped memory for _fused_patch_embed.1']
    %8 = vsyncpa [#allocation4], 0
    %s9 = scalar_lea.sflag [#allocation4], 1
    %10 = vsyncpa %s9, 0
    loop: start=0, step=1, limit=4
    $region2: #{_fused_patch_embed.1} parent=1 // loop_pre_header
      _
    $region3: #{_fused_patch_embed.1} parent=1 // loop_header
      %s12 = sphi 0, %s16
      %p13 = scmp.ge.s32.totalorder %s12, 4
      %s19 = sphi 0, %s31
      %s20 = sphi 0, %s27
      %s21 = sphi 0, %s19
      %s22 = sphi 0, %s20
      %s23 = sphi 0, %s21
      %s24 = sphi 0, %s22
      %s36 = sphi 0, %s38
      %s39 = sphi 0, %s36
      %s40 = sphi 0, %s39
      %s56 = sphi 0, %s40
      %s60 = sphi 0, %s60
      %s62 = sphi 0, %s60
      %s63 = sphi 0, %s62
      %s77 = sphi 0, %s63
      %s81 = sphi 0, %s81
      %s83 = sphi 0, %s81
      %s84 = sphi 0, %s83
      %s98 = sphi 0, %s84
      %s106 = sphi 0, %s108
      %s109 = sphi 0, %s106
      %s110 = sphi 0, %s109
      %s126 = sphi 0, %s110
    $region4: #{_fused_patch_embed.1} parent=1 // loop_header_branch
      %15 = sbr.rel (%p13) target = $region8
    $region5: #{_fused_patch_embed.1} parent=1 // loop_body
      %s17 = ssub.s32 %s12, 1
      %s18 = ssub.s32 %s12, 2
      %s25 = sadd.s32 1, %s20
      %p26 = scmp.ge.s32.totalorder %s25, 2
      %s27 = scalar_select %p26, 0, %s25
      %s28 = sadd.s32 1, %s19
      %s29 = scalar_select %p26, %s28, %s19
      %p30 = scmp.ge.s32.totalorder %s29, 1
      %s31 = scalar_select %p30, 0, %s29
      %s32 = ssub.s32 %s19, %s31
      %s33 = ssub.s32 %s20, %s27
      %s34 = sor.u32 %s32, %s33
      %p35 = scmp.eq.s32.totalorder %s34, 0
      %s37 = sadd.s32 %s36, 1
      %s38 = scalar_select %p35, %s36, %s37
      %p41 = pneg %p35
      %p42 = scmp.eq.s32.totalorder %s12, 1
      %p43 = por %p41, %p42
      %p44 = scmp.ne.s32.totalorder %s36, %s39
      %p45 = scmp.eq.s32.totalorder %s12, 0
      %p46 = por %p44, %p45
      %p47 = scmp.ne.s32.totalorder %s36, %s39
      %p48 = scmp.eq.s32.totalorder %s17, 1
      %p49 = por %p47, %p48
      %p50 = scmp.ne.s32.totalorder %s39, %s40
      %p51 = scmp.eq.s32.totalorder %s17, 0
      %p52 = por %p50, %p51
      %p53 = scmp.ne.s32.totalorder %s39, %s40
      %p54 = scmp.eq.s32.totalorder %s18, 1
      %p55 = por %p53, %p54
      %p57 = scmp.ne.s32.totalorder %s40, %s56
      %p58 = scmp.eq.s32.totalorder %s18, 0
      %p59 = por %p57, %p58
      %s61 = sadd.s32 %s60, 1
      %p64 = scmp.eq.s32.totalorder %s12, 1
      %p65 = scmp.ne.s32.totalorder %s60, %s62
      %p66 = scmp.eq.s32.totalorder %s12, 0
      %p67 = por %p65, %p66
      %p68 = scmp.ne.s32.totalorder %s60, %s62
      %p69 = scmp.eq.s32.totalorder %s17, 1
      %p70 = por %p68, %p69
      %p71 = scmp.ne.s32.totalorder %s62, %s63
      %p72 = scmp.eq.s32.totalorder %s17, 0
      %p73 = por %p71, %p72
      %p74 = scmp.ne.s32.totalorder %s62, %s63
      %p75 = scmp.eq.s32.totalorder %s18, 1
      %p76 = por %p74, %p75
      %p78 = scmp.ne.s32.totalorder %s63, %s77
      %p79 = scmp.eq.s32.totalorder %s18, 0
      %p80 = por %p78, %p79
      %s82 = sadd.s32 %s81, 1
      %p85 = scmp.eq.s32.totalorder %s12, 1
      %p86 = scmp.ne.s32.totalorder %s81, %s83
      %p87 = scmp.eq.s32.totalorder %s12, 0
      %p88 = por %p86, %p87
      %p89 = scmp.ne.s32.totalorder %s81, %s83
      %p90 = scmp.eq.s32.totalorder %s17, 1
      %p91 = por %p89, %p90
      %p92 = scmp.ne.s32.totalorder %s83, %s84
      %p93 = scmp.eq.s32.totalorder %s17, 0
      %p94 = por %p92, %p93
      %p95 = scmp.ne.s32.totalorder %s83, %s84
      %p96 = scmp.eq.s32.totalorder %s18, 1
      %p97 = por %p95, %p96
      %p99 = scmp.ne.s32.totalorder %s84, %s98
      %p100 = scmp.eq.s32.totalorder %s18, 0
      %p101 = por %p99, %p100
      %s102 = ssub.s32 %s19, %s31
      %s103 = ssub.s32 %s20, %s27
      %s104 = sor.u32 %s102, %s103
      %p105 = scmp.eq.s32.totalorder %s104, 0
      %s107 = sadd.s32 %s106, 1
      %s108 = scalar_select %p105, %s106, %s107
      %p111 = pneg %p105
      %p112 = scmp.eq.s32.totalorder %s12, 1
      %p113 = por %p111, %p112
      %p114 = scmp.ne.s32.totalorder %s106, %s109
      %p115 = scmp.eq.s32.totalorder %s12, 0
      %p116 = por %p114, %p115
      %p117 = scmp.ne.s32.totalorder %s106, %s109
      %p118 = scmp.eq.s32.totalorder %s17, 1
      %p119 = por %p117, %p118
      %p120 = scmp.ne.s32.totalorder %s109, %s110
      %p121 = scmp.eq.s32.totalorder %s17, 0
      %p122 = por %p120, %p121
      %p123 = scmp.ne.s32.totalorder %s109, %s110
      %p124 = scmp.eq.s32.totalorder %s18, 1
      %p125 = por %p123, %p124
      %p127 = scmp.ne.s32.totalorder %s110, %s126
      %p128 = scmp.eq.s32.totalorder %s18, 0
      %p129 = por %p127, %p128
      %p130 = scmp.le.s32.totalorder 1, %s12
      %p131 = scmp.lt.s32.totalorder %s12, 3
      %p132 = pnand %p130, %p131
      %p133 = pneg %p132
      // Predicated region
      $region9: #{_fused_patch_embed.1} parent=5 // pred_check
        _
      $region10: #{_fused_patch_embed.1} parent=5 // pred_check_branch
        %135 = sbr.rel (%p132) target = $region12
      $region11: #{_fused_patch_embed.1} parent=5 // pred_region
        %s136 = ssub.s32 %s12, 1
        // Predicated region
        $region13: #{_fused_patch_embed.1} parent=11 // pred_check
          %p137 = pneg %p73
        $region14: #{_fused_patch_embed.1} parent=11 // pred_check_branch
          %139 = sbr.rel (%p137) target = $region16
        $region15: #{_fused_patch_embed.1} parent=11 // pred_region
          _
        $region16: #{_fused_patch_embed.1} parent=11 // pred_fallthru
          _
        // Predicated region
        $region17: #{_fused_patch_embed.1} parent=11 // pred_check
          %p140 = pneg %p94
        $region18: #{_fused_patch_embed.1} parent=11 // pred_check_branch
          %142 = sbr.rel (%p140) target = $region20
        $region19: #{_fused_patch_embed.1} parent=11 // pred_region
          _
        $region20: #{_fused_patch_embed.1} parent=11 // pred_fallthru
          _
      $region12: #{_fused_patch_embed.1} parent=5 // pred_fallthru
        _
      %p143 = scmp.lt.s32.totalorder %s12, 2
      // Predicated region
      $region21: #{_fused_patch_embed.1} parent=5 // pred_check
        %p144 = pneg %p143
      $region22: #{_fused_patch_embed.1} parent=5 // pred_check_branch
        %146 = sbr.rel (%p144) target = $region24
      $region23: #{_fused_patch_embed.1} parent=5 // pred_region
        // Predicated region
        $region25: #{_fused_patch_embed.1} parent=23 // pred_check
          %p147 = pneg %p46
        $region26: #{_fused_patch_embed.1} parent=23 // pred_check_branch
          %149 = sbr.rel (%p147) target = $region28
        $region27: #{_fused_patch_embed.1} parent=23 // pred_region
          %s150 = sand.u32 %s36, 1
          %s151 = sand.u32 %s36, 1
          %s152 = smul.addr %s151, 96
          %s153 = scalar_lea.vmem [#allocation2], %s152
          %s154 = smul.u32 4, %s19
          %s155 = smul.addr %s154, 6
          %s156 = sadd.s32 %s20, %s155
          %s157 = smul.addr %s156, 8
          %s158 = scalar_lea.vmem %s0, %s157
          // Predicated region
          $region29: #{_fused_patch_embed.1} parent=27 // pred_check
            _
          $region30: #{_fused_patch_embed.1} parent=27 // pred_check_branch
            %160 = sbr.rel (0) target = $region32
          $region31: #{_fused_patch_embed.1} parent=27 // pred_region
            // Predicated region
            $region33: #{_fused_patch_embed.1} parent=31 // pred_check
              _
            $region34: #{_fused_patch_embed.1} parent=31 // pred_check_branch
              %162 = sbr.rel (0) target = $region36
            $region35: #{_fused_patch_embed.1} parent=31 // pred_region
              // Predicated region
              $region48: #{_fused_patch_embed.1} parent=35 // pred_check
                _
              $region49: #{_fused_patch_embed.1} parent=35 // pred_check_branch
                %200 = sbr.rel (0) target = $region51
              $region50: #{_fused_patch_embed.1} parent=35 // pred_region
                loop: start=0, step=1, limit=1
                $region52: #{_fused_patch_embed.1} parent=50 // loop_pre_header
                  _
                $region53: #{_fused_patch_embed.1} parent=50 // loop_header
                  %s202 = sphi 0, %s206
                  %p203 = scmp.ge.s32.totalorder %s202, 1
                  %s207 = sphi %s158, %s158
                  %s208 = sphi %s153, %s153
                $region54: #{_fused_patch_embed.1} parent=50 // loop_header_branch
                  %205 = sbr.rel (%p203) target = $region58
                $region55: #{_fused_patch_embed.1} parent=50 // loop_body
                  %v209 = vld [vmem:[%s207] sm:$0xff]
                  %210 = vst [vmem:[%s208] sm:$0xff] %v209
                  %v211 = vld [vmem:[%s207 + $0x10] sm:$0xff]
                  %212 = vst [vmem:[%s208 + $0x8] sm:$0xff] %v211
                  %v213 = vld [vmem:[%s207 + $0x20] sm:$0xff]
                  %214 = vst [vmem:[%s208 + $0x10] sm:$0xff] %v213
                  %v215 = vld [vmem:[%s207 + $0x30] sm:$0xff]
                  %216 = vst [vmem:[%s208 + $0x18] sm:$0xff] %v215
                  %v217 = vld [vmem:[%s207 + $0x40] sm:$0xff]
                  %218 = vst [vmem:[%s208 + $0x20] sm:$0xff] %v217
                  %v219 = vld [vmem:[%s207 + $0x50] sm:$0xff]
                  %220 = vst [vmem:[%s208 + $0x28] sm:$0xff] %v219
                  %v221 = vld [vmem:[%s207 + $0x60] sm:$0xff]
                  %222 = vst [vmem:[%s208 + $0x30] sm:$0xff] %v221
                  %v223 = vld [vmem:[%s207 + $0x70] sm:$0xff]
                  %224 = vst [vmem:[%s208 + $0x38] sm:$0xff] %v223
                  %v225 = vld [vmem:[%s207 + $0x80] sm:$0xff]
                  %226 = vst [vmem:[%s208 + $0x40] sm:$0xff] %v225
                  %v227 = vld [vmem:[%s207 + $0x90] sm:$0xff]
                  %228 = vst [vmem:[%s208 + $0x48] sm:$0xff] %v227
                  %v229 = vld [vmem:[%s207 + $0xa0] sm:$0xff]
                  %230 = vst [vmem:[%s208 + $0x50] sm:$0xff] %v229
                  %v231 = vld [vmem:[%s207 + $0xb0] sm:$0xff]
                  %232 = vst [vmem:[%s208 + $0x58] sm:$0xff] %v231
                $region56: #{_fused_patch_embed.1} parent=50 // loop_footer
                  %s206 = sadd.s32 1, %s202
                $region57: #{_fused_patch_embed.1} parent=50 // loop_footer_branch
                  %201 = sbr.rel target = $region53
                $region58: #{_fused_patch_embed.1} parent=50 // loop_exit
                  _
              $region51: #{_fused_patch_embed.1} parent=35 // pred_fallthru
                _
              // Predicated region
              $region59: #{_fused_patch_embed.1} parent=35 // pred_check
                _
              $region60: #{_fused_patch_embed.1} parent=35 // pred_check_branch
                %234 = sbr.rel target = $region62
              $region61: #{_fused_patch_embed.1} parent=35 // pred_region
                _
              $region62: #{_fused_patch_embed.1} parent=35 // pred_fallthru
                _
            $region36: #{_fused_patch_embed.1} parent=31 // pred_fallthru
              _
            // Predicated region
            $region37: #{_fused_patch_embed.1} parent=31 // pred_check
              _
            $region38: #{_fused_patch_embed.1} parent=31 // pred_check_branch
              %164 = sbr.rel target = $region40
            $region39: #{_fused_patch_embed.1} parent=31 // pred_region
              %s166 = ssub.s32 256, 1
              loop: start=0, step=1, limit=1
              $region41: #{_fused_patch_embed.1} parent=39 // loop_pre_header
                _
              $region42: #{_fused_patch_embed.1} parent=39 // loop_header
                %s168 = sphi 0, %s172
                %p169 = scmp.ge.s32.totalorder %s168, 1
                %s173 = sphi %s158, %s158
                %s174 = sphi %s153, %s153
              $region43: #{_fused_patch_embed.1} parent=39 // loop_header_branch
                %171 = sbr.rel (%p169) target = $region47
              $region44: #{_fused_patch_embed.1} parent=39 // loop_body
                %v175 = vld [vmem:[%s173] sm:%s166]
                %176 = vst [vmem:[%s174] sm:%s166] %v175
                %v177 = vld [vmem:[%s173 + $0x10] sm:%s166]
                %178 = vst [vmem:[%s174 + $0x8] sm:%s166] %v177
                %v179 = vld [vmem:[%s173 + $0x20] sm:%s166]
                %180 = vst [vmem:[%s174 + $0x10] sm:%s166] %v179
                %v181 = vld [vmem:[%s173 + $0x30] sm:%s166]
                %182 = vst [vmem:[%s174 + $0x18] sm:%s166] %v181
                %v183 = vld [vmem:[%s173 + $0x40] sm:%s166]
                %184 = vst [vmem:[%s174 + $0x20] sm:%s166] %v183
                %v185 = vld [vmem:[%s173 + $0x50] sm:%s166]
                %186 = vst [vmem:[%s174 + $0x28] sm:%s166] %v185
                %v187 = vld [vmem:[%s173 + $0x60] sm:%s166]
                %188 = vst [vmem:[%s174 + $0x30] sm:%s166] %v187
                %v189 = vld [vmem:[%s173 + $0x70] sm:%s166]
                %190 = vst [vmem:[%s174 + $0x38] sm:%s166] %v189
                %v191 = vld [vmem:[%s173 + $0x80] sm:%s166]
                %192 = vst [vmem:[%s174 + $0x40] sm:%s166] %v191
                %v193 = vld [vmem:[%s173 + $0x90] sm:%s166]
                %194 = vst [vmem:[%s174 + $0x48] sm:%s166] %v193
                %v195 = vld [vmem:[%s173 + $0xa0] sm:%s166]
                %196 = vst [vmem:[%s174 + $0x50] sm:%s166] %v195
                %v197 = vld [vmem:[%s173 + $0xb0] sm:%s166]
                %198 = vst [vmem:[%s174 + $0x58] sm:%s166] %v197
              $region45: #{_fused_patch_embed.1} parent=39 // loop_footer
                %s172 = sadd.s32 1, %s168
              $region46: #{_fused_patch_embed.1} parent=39 // loop_footer_branch
                %167 = sbr.rel target = $region42
              $region47: #{_fused_patch_embed.1} parent=39 // loop_exit
                _
            $region40: #{_fused_patch_embed.1} parent=31 // pred_fallthru
              _
          $region32: #{_fused_patch_embed.1} parent=27 // pred_fallthru
            _
          %235 = vnop
        $region28: #{_fused_patch_embed.1} parent=23 // pred_fallthru
          _
      $region24: #{_fused_patch_embed.1} parent=5 // pred_fallthru
        _
      %p236 = scmp.le.s32.totalorder 1, %s12
      %p237 = scmp.lt.s32.totalorder %s12, 3
      %p238 = pnand %p236, %p237
      %p239 = pneg %p238
      // Predicated region
      $region63: #{_fused_patch_embed.1} parent=5 // pred_check
        _
      $region64: #{_fused_patch_embed.1} parent=5 // pred_check_branch
        %241 = sbr.rel (%p238) target = $region66
      $region65: #{_fused_patch_embed.1} parent=5 // pred_region
        %s242 = ssub.s32 %s12, 1
        %s243 = sand.u32 %s39, 1
        %s244 = sand.u32 %s39, 1
        %s245 = smul.addr %s244, 96
        %s246 = scalar_lea.vmem [#allocation2], %s245
        // Predicated region
        $region67: #{_fused_patch_embed.1} parent=65 // pred_check
          %p247 = pneg %p52
        $region68: #{_fused_patch_embed.1} parent=65 // pred_check_branch
          %249 = sbr.rel (%p247) target = $region70
        $region69: #{_fused_patch_embed.1} parent=65 // pred_region
          _
        $region70: #{_fused_patch_embed.1} parent=65 // pred_fallthru
          _
        %s250 = sand.u32 %s39, 1
        %s251 = sand.u32 %s39, 1
        %s252 = smul.addr %s251, 96
        %s253 = scalar_lea.vmem [#allocation2], %s252
        %p254 = pneg %p52
        %p255 = pneg %p49
        %p256 = pneg %p73
        %p257 = pneg %p70
        %p258 = pneg %p94
        %p259 = pneg %p91
        %p260 = pneg %p122
        %p261 = pneg %p119
        %s262 = sand.u32 %s109, 1
        %s263 = scalar_lea.sflag [#allocation4], %s262
        %s264 = sand.u32 %s109, 1
        %s265 = smul.addr %s264, 8
        %s266 = scalar_lea.vmem [#allocation3], %s265
        %s267 = smul.u32 4, %s21
        %s268 = smul.u32 4, %s21
        %v269 = vld [vmem:[%s1] sm:$0xff]
        %v270 = vld [vmem:[%s1 + $0x8] sm:$0xff]
        %v271 = vld [vmem:[%s1 + $0x10] sm:$0xff]
        %v272 = vld [vmem:[%s1 + $0x18] sm:$0xff]
        %v273 = vld [vmem:[%s1 + $0x20] sm:$0xff]
        %v274 = vld [vmem:[%s1 + $0x28] sm:$0xff]
        %v275 = vld [vmem:[%s1 + $0x30] sm:$0xff]
        %v276 = vld [vmem:[%s1 + $0x38] sm:$0xff]
        %v277 = vld [vmem:[%s1 + $0x40] sm:$0xff]
        %v278 = vld [vmem:[%s1 + $0x48] sm:$0xff]
        %v279 = vld [vmem:[%s1 + $0x50] sm:$0xff]
        %v280 = vld [vmem:[%s1 + $0x58] sm:$0xff]
        %v281 = vld [vmem:[%s1 + $0x60] sm:$0xff]
        %v282 = vld [vmem:[%s1 + $0x68] sm:$0xff]
        %v283 = vld [vmem:[%s1 + $0x70] sm:$0xff]
        %v284 = vld [vmem:[%s1 + $0x78] sm:$0xff]
        %v285 = vld [vmem:[%s1 + $0x80] sm:$0xff]
        %v286 = vld [vmem:[%s1 + $0x88] sm:$0xff]
        %v287 = vld [vmem:[%s1 + $0x90] sm:$0xff]
        %v288 = vld [vmem:[%s1 + $0x98] sm:$0xff]
        %v289 = vld [vmem:[%s1 + $0xa0] sm:$0xff]
        %v290 = vld [vmem:[%s1 + $0xa8] sm:$0xff]
        %v291 = vld [vmem:[%s1 + $0xb0] sm:$0xff]
        %v292 = vld [vmem:[%s1 + $0xb8] sm:$0xff]
        %v293 = vld [vmem:[%s2] sm:$0x1]
        %v294 = vld [vmem:[%s246] sm:$0x1]
        %v295 = vld [vmem:[%s246 + $0x18] sm:$0x1]
        %v296 = vld [vmem:[%s246 + $0x30] sm:$0x1]
        %v297 = vld [vmem:[%s246 + $0x48] sm:$0x1]
        %v298 = vld [vmem:[%s246 + $0x1] sm:$0x1]
        %v299 = vld [vmem:[%s246 + $0x19] sm:$0x1]
        %v300 = vld [vmem:[%s246 + $0x31] sm:$0x1]
        %v301 = vld [vmem:[%s246 + $0x49] sm:$0x1]
        %v302 = vld [vmem:[%s246 + $0x2] sm:$0x1]
        %v303 = vld [vmem:[%s246 + $0x1a] sm:$0x1]
        %v304 = vld [vmem:[%s246 + $0x32] sm:$0x1]
        %v305 = vld [vmem:[%s246 + $0x4a] sm:$0x1]
        %v306 = vld [vmem:[%s246 + $0x3] sm:$0x1]
        %v307 = vld [vmem:[%s246 + $0x1b] sm:$0x1]
        %v308 = vld [vmem:[%s246 + $0x33] sm:$0x1]
        %v309 = vld [vmem:[%s246 + $0x4b] sm:$0x1]
        %v310 = vld [vmem:[%s246 + $0x4] sm:$0x1]
        %v311 = vld [vmem:[%s246 + $0x1c] sm:$0x1]
        %v312 = vld [vmem:[%s246 + $0x34] sm:$0x1]
        %v313 = vld [vmem:[%s246 + $0x4c] sm:$0x1]
        %v314 = vld [vmem:[%s246 + $0x5] sm:$0x1]
        %v315 = vld [vmem:[%s246 + $0x1d] sm:$0x1]
        %v316 = vld [vmem:[%s246 + $0x35] sm:$0x1]
        %v317 = vld [vmem:[%s246 + $0x4d] sm:$0x1]
        %v318 = vld [vmem:[%s246 + $0x6] sm:$0x1]
        %v319 = vld [vmem:[%s246 + $0x1e] sm:$0x1]
        %v320 = vld [vmem:[%s246 + $0x36] sm:$0x1]
        %v321 = vld [vmem:[%s246 + $0x4e] sm:$0x1]
        %v322 = vld [vmem:[%s246 + $0x7] sm:$0x1]
        %v323 = vld [vmem:[%s246 + $0x1f] sm:$0x1]
        %v324 = vld [vmem:[%s246 + $0x37] sm:$0x1]
        %v325 = vld [vmem:[%s246 + $0x4f] sm:$0x1]
        %s326 = scalar_lea.vmem %s246, 8 [#allocation2]
        %v327 = vld [vmem:[%s326] sm:$0x1]
        %v328 = vld [vmem:[%s326 + $0x18] sm:$0x1]
        %v329 = vld [vmem:[%s326 + $0x30] sm:$0x1]
        %v330 = vld [vmem:[%s326 + $0x48] sm:$0x1]
        %v331 = vld [vmem:[%s326 + $0x1] sm:$0x1]
        %v332 = vld [vmem:[%s326 + $0x19] sm:$0x1]
        %v333 = vld [vmem:[%s326 + $0x31] sm:$0x1]
        %v334 = vld [vmem:[%s326 + $0x49] sm:$0x1]
        %v335 = vld [vmem:[%s326 + $0x2] sm:$0x1]
        %v336 = vld [vmem:[%s326 + $0x1a] sm:$0x1]
        %v337 = vld [vmem:[%s326 + $0x32] sm:$0x1]
        %v338 = vld [vmem:[%s326 + $0x4a] sm:$0x1]
        %v339 = vld [vmem:[%s326 + $0x3] sm:$0x1]
        %v340 = vld [vmem:[%s326 + $0x1b] sm:$0x1]
        %v341 = vld [vmem:[%s326 + $0x33] sm:$0x1]
        %v342 = vld [vmem:[%s326 + $0x4b] sm:$0x1]
        %v343 = vld [vmem:[%s326 + $0x4] sm:$0x1]
        %v344 = vld [vmem:[%s326 + $0x1c] sm:$0x1]
        %v345 = vld [vmem:[%s326 + $0x34] sm:$0x1]
        %v346 = vld [vmem:[%s326 + $0x4c] sm:$0x1]
        %v347 = vld [vmem:[%s326 + $0x5] sm:$0x1]
        %v348 = vld [vmem:[%s326 + $0x1d] sm:$0x1]
        %v349 = vld [vmem:[%s326 + $0x35] sm:$0x1]
        %v350 = vld [vmem:[%s326 + $0x4d] sm:$0x1]
        %v351 = vld [vmem:[%s326 + $0x6] sm:$0x1]
        %v352 = vld [vmem:[%s326 + $0x1e] sm:$0x1]
        %v353 = vld [vmem:[%s326 + $0x36] sm:$0x1]
        %v354 = vld [vmem:[%s326 + $0x4e] sm:$0x1]
        %v355 = vld [vmem:[%s326 + $0x7] sm:$0x1]
        %v356 = vld [vmem:[%s326 + $0x1f] sm:$0x1]
        %v357 = vld [vmem:[%s326 + $0x37] sm:$0x1]
        %v358 = vld [vmem:[%s326 + $0x4f] sm:$0x1]
        %s359 = scalar_lea.vmem %s246, 16 [#allocation2]
        %v360 = vld [vmem:[%s359] sm:$0x1]
        %v361 = vld [vmem:[%s359 + $0x18] sm:$0x1]
        %v362 = vld [vmem:[%s359 + $0x30] sm:$0x1]
        %v363 = vld [vmem:[%s359 + $0x48] sm:$0x1]
        %v364 = vld [vmem:[%s359 + $0x1] sm:$0x1]
        %v365 = vld [vmem:[%s359 + $0x19] sm:$0x1]
        %v366 = vld [vmem:[%s359 + $0x31] sm:$0x1]
        %v367 = vld [vmem:[%s359 + $0x49] sm:$0x1]
        %v368 = vld [vmem:[%s359 + $0x2] sm:$0x1]
        %v369 = vld [vmem:[%s359 + $0x1a] sm:$0x1]
        %v370 = vld [vmem:[%s359 + $0x32] sm:$0x1]
        %v371 = vld [vmem:[%s359 + $0x4a] sm:$0x1]
        %v372 = vld [vmem:[%s359 + $0x3] sm:$0x1]
        %v373 = vld [vmem:[%s359 + $0x1b] sm:$0x1]
        %v374 = vld [vmem:[%s359 + $0x33] sm:$0x1]
        %v375 = vld [vmem:[%s359 + $0x4b] sm:$0x1]
        %v376 = vld [vmem:[%s359 + $0x4] sm:$0x1]
        %v377 = vld [vmem:[%s359 + $0x1c] sm:$0x1]
        %v378 = vld [vmem:[%s359 + $0x34] sm:$0x1]
        %v379 = vld [vmem:[%s359 + $0x4c] sm:$0x1]
        %v380 = vld [vmem:[%s359 + $0x5] sm:$0x1]
        %v381 = vld [vmem:[%s359 + $0x1d] sm:$0x1]
        %v382 = vld [vmem:[%s359 + $0x35] sm:$0x1]
        %v383 = vld [vmem:[%s359 + $0x4d] sm:$0x1]
        %v384 = vld [vmem:[%s359 + $0x6] sm:$0x1]
        %v385 = vld [vmem:[%s359 + $0x1e] sm:$0x1]
        %v386 = vld [vmem:[%s359 + $0x36] sm:$0x1]
        %v387 = vld [vmem:[%s359 + $0x4e] sm:$0x1]
        %v388 = vld [vmem:[%s359 + $0x7] sm:$0x1]
        %v389 = vld [vmem:[%s359 + $0x1f] sm:$0x1]
        %v390 = vld [vmem:[%s359 + $0x37] sm:$0x1]
        %v391 = vld [vmem:[%s359 + $0x4f] sm:$0x1]
        %v396 = vrot.slane %v295, 7
        %vm397 = vcmask 1041409
        %v398 = vsel %vm397, %v396, %v294
        %v399 = vrot.slane %v296, 6
        %vm400 = vcmask 1042434
        %v401 = vsel %vm400, %v399, %v398
        %v402 = vrot.slane %v297, 5
        %vm403 = vcmask 1043459
        %v404 = vsel %vm403, %v402, %v401
        %v410 = vrot.slane %v299, 7
        %v411 = vsel %vm397, %v410, %v298
        %v412 = vrot.slane %v300, 6
        %v413 = vsel %vm400, %v412, %v411
        %v414 = vrot.slane %v301, 5
        %v415 = vsel %vm403, %v414, %v413
        %416 = vrot.lane.b32.xlu0 %v415, 8
        %v417 = vpop.permute.xlu0 %416
        %v423 = vrot.slane %v303, 7
        %v424 = vsel %vm397, %v423, %v302
        %v425 = vrot.slane %v304, 6
        %v426 = vsel %vm400, %v425, %v424
        %v427 = vrot.slane %v305, 5
        %v428 = vsel %vm403, %v427, %v426
        %429 = vrot.lane.b32.xlu0 %v428, 16
        %v430 = vpop.permute.xlu0 %429
        %v436 = vrot.slane %v307, 7
        %v437 = vsel %vm397, %v436, %v306
        %v438 = vrot.slane %v308, 6
        %v439 = vsel %vm400, %v438, %v437
        %v440 = vrot.slane %v309, 5
        %v441 = vsel %vm403, %v440, %v439
        %442 = vrot.lane.b32.xlu0 %v441, 24
        %v443 = vpop.permute.xlu0 %442
        %v449 = vrot.slane %v311, 7
        %v450 = vsel %vm397, %v449, %v310
        %v451 = vrot.slane %v312, 6
        %v452 = vsel %vm400, %v451, %v450
        %v453 = vrot.slane %v313, 5
        %v454 = vsel %vm403, %v453, %v452
        %455 = vrot.lane.b32.xlu0 %v454, 32
        %v456 = vpop.permute.xlu0 %455
        %v462 = vrot.slane %v315, 7
        %v463 = vsel %vm397, %v462, %v314
        %v464 = vrot.slane %v316, 6
        %v465 = vsel %vm400, %v464, %v463
        %v466 = vrot.slane %v317, 5
        %v467 = vsel %vm403, %v466, %v465
        %468 = vrot.lane.b32.xlu0 %v467, 40
        %v469 = vpop.permute.xlu0 %468
        %v475 = vrot.slane %v319, 7
        %v476 = vsel %vm397, %v475, %v318
        %v477 = vrot.slane %v320, 6
        %v478 = vsel %vm400, %v477, %v476
        %v479 = vrot.slane %v321, 5
        %v480 = vsel %vm403, %v479, %v478
        %481 = vrot.lane.b32.xlu0 %v480, 48
        %v482 = vpop.permute.xlu0 %481
        %v488 = vrot.slane %v323, 7
        %v489 = vsel %vm397, %v488, %v322
        %v490 = vrot.slane %v324, 6
        %v491 = vsel %vm400, %v490, %v489
        %v492 = vrot.slane %v325, 5
        %v493 = vsel %vm403, %v492, %v491
        %494 = vrot.lane.b32.xlu0 %v493, 56
        %v495 = vpop.permute.xlu0 %494
        %v501 = vrot.slane %v328, 7
        %v502 = vsel %vm397, %v501, %v327
        %v503 = vrot.slane %v329, 6
        %v504 = vsel %vm400, %v503, %v502
        %v505 = vrot.slane %v330, 5
        %v506 = vsel %vm403, %v505, %v504
        %507 = vrot.lane.b32.xlu0 %v506, 64
        %v508 = vpop.permute.xlu0 %507
        %v514 = vrot.slane %v332, 7
        %v515 = vsel %vm397, %v514, %v331
        %v516 = vrot.slane %v333, 6
        %v517 = vsel %vm400, %v516, %v515
        %v518 = vrot.slane %v334, 5
        %v519 = vsel %vm403, %v518, %v517
        %520 = vrot.lane.b32.xlu0 %v519, 72
        %v521 = vpop.permute.xlu0 %520
        %v527 = vrot.slane %v336, 7
        %v528 = vsel %vm397, %v527, %v335
        %v529 = vrot.slane %v337, 6
        %v530 = vsel %vm400, %v529, %v528
        %v531 = vrot.slane %v338, 5
        %v532 = vsel %vm403, %v531, %v530
        %533 = vrot.lane.b32.xlu0 %v532, 80
        %v534 = vpop.permute.xlu0 %533
        %v540 = vrot.slane %v340, 7
        %v541 = vsel %vm397, %v540, %v339
        %v542 = vrot.slane %v341, 6
        %v543 = vsel %vm400, %v542, %v541
        %v544 = vrot.slane %v342, 5
        %v545 = vsel %vm403, %v544, %v543
        %546 = vrot.lane.b32.xlu0 %v545, 88
        %v547 = vpop.permute.xlu0 %546
        %v553 = vrot.slane %v344, 7
        %v554 = vsel %vm397, %v553, %v343
        %v555 = vrot.slane %v345, 6
        %v556 = vsel %vm400, %v555, %v554
        %v557 = vrot.slane %v346, 5
        %v558 = vsel %vm403, %v557, %v556
        %559 = vrot.lane.b32.xlu0 %v558, 96
        %v560 = vpop.permute.xlu0 %559
        %v566 = vrot.slane %v348, 7
        %v567 = vsel %vm397, %v566, %v347
        %v568 = vrot.slane %v349, 6
        %v569 = vsel %vm400, %v568, %v567
        %v570 = vrot.slane %v350, 5
        %v571 = vsel %vm403, %v570, %v569
        %572 = vrot.lane.b32.xlu0 %v571, 104
        %v573 = vpop.permute.xlu0 %572
        %v579 = vrot.slane %v352, 7
        %v580 = vsel %vm397, %v579, %v351
        %v581 = vrot.slane %v353, 6
        %v582 = vsel %vm400, %v581, %v580
        %v583 = vrot.slane %v354, 5
        %v584 = vsel %vm403, %v583, %v582
        %585 = vrot.lane.b32.xlu0 %v584, 112
        %v586 = vpop.permute.xlu0 %585
        %v592 = vrot.slane %v356, 7
        %v593 = vsel %vm397, %v592, %v355
        %v594 = vrot.slane %v357, 6
        %v595 = vsel %vm400, %v594, %v593
        %v596 = vrot.slane %v358, 5
        %v597 = vsel %vm403, %v596, %v595
        %598 = vrot.lane.b32.xlu0 %v597, 120
        %v599 = vpop.permute.xlu0 %598
        %vm601 = vcmask 64512
        %v602 = vsel %vm601, %v404, %v417
        %vm603 = vcmask 130048
        %v604 = vsel %vm603, %v602, %v430
        %vm605 = vcmask 195584
        %v606 = vsel %vm605, %v604, %v443
        %vm607 = vcmask 261120
        %v608 = vsel %vm607, %v606, %v456
        %vm609 = vcmask 326656
        %v610 = vsel %vm609, %v608, %v469
        %vm611 = vcmask 392192
        %v612 = vsel %vm611, %v610, %v482
        %vm613 = vcmask 457728
        %v614 = vsel %vm613, %v612, %v495
        %vm615 = vcmask 523264
        %v616 = vsel %vm615, %v614, %v508
        %vm617 = vcmask 588800
        %v618 = vsel %vm617, %v616, %v521
        %vm619 = vcmask 654336
        %v620 = vsel %vm619, %v618, %v534
        %vm621 = vcmask 719872
        %v622 = vsel %vm621, %v620, %v547
        %vm623 = vcmask 785408
        %v624 = vsel %vm623, %v622, %v560
        %vm625 = vcmask 850944
        %v626 = vsel %vm625, %v624, %v573
        %vm627 = vcmask 916480
        %v628 = vsel %vm627, %v626, %v586
        %vm629 = vcmask 982016
        %v630 = vsel %vm629, %v628, %v599
        %v635 = vrot.slane %v361, 7
        %v636 = vsel %vm397, %v635, %v360
        %v637 = vrot.slane %v362, 6
        %v638 = vsel %vm400, %v637, %v636
        %v639 = vrot.slane %v363, 5
        %v640 = vsel %vm403, %v639, %v638
        %v646 = vrot.slane %v365, 7
        %v647 = vsel %vm397, %v646, %v364
        %v648 = vrot.slane %v366, 6
        %v649 = vsel %vm400, %v648, %v647
        %v650 = vrot.slane %v367, 5
        %v651 = vsel %vm403, %v650, %v649
        %652 = vrot.lane.b32.xlu0 %v651, 8
        %v653 = vpop.permute.xlu0 %652
        %v659 = vrot.slane %v369, 7
        %v660 = vsel %vm397, %v659, %v368
        %v661 = vrot.slane %v370, 6
        %v662 = vsel %vm400, %v661, %v660
        %v663 = vrot.slane %v371, 5
        %v664 = vsel %vm403, %v663, %v662
        %665 = vrot.lane.b32.xlu0 %v664, 16
        %v666 = vpop.permute.xlu0 %665
        %v672 = vrot.slane %v373, 7
        %v673 = vsel %vm397, %v672, %v372
        %v674 = vrot.slane %v374, 6
        %v675 = vsel %vm400, %v674, %v673
        %v676 = vrot.slane %v375, 5
        %v677 = vsel %vm403, %v676, %v675
        %678 = vrot.lane.b32.xlu0 %v677, 24
        %v679 = vpop.permute.xlu0 %678
        %v685 = vrot.slane %v377, 7
        %v686 = vsel %vm397, %v685, %v376
        %v687 = vrot.slane %v378, 6
        %v688 = vsel %vm400, %v687, %v686
        %v689 = vrot.slane %v379, 5
        %v690 = vsel %vm403, %v689, %v688
        %691 = vrot.lane.b32.xlu0 %v690, 32
        %v692 = vpop.permute.xlu0 %691
        %v698 = vrot.slane %v381, 7
        %v699 = vsel %vm397, %v698, %v380
        %v700 = vrot.slane %v382, 6
        %v701 = vsel %vm400, %v700, %v699
        %v702 = vrot.slane %v383, 5
        %v703 = vsel %vm403, %v702, %v701
        %704 = vrot.lane.b32.xlu0 %v703, 40
        %v705 = vpop.permute.xlu0 %704
        %v711 = vrot.slane %v385, 7
        %v712 = vsel %vm397, %v711, %v384
        %v713 = vrot.slane %v386, 6
        %v714 = vsel %vm400, %v713, %v712
        %v715 = vrot.slane %v387, 5
        %v716 = vsel %vm403, %v715, %v714
        %717 = vrot.lane.b32.xlu0 %v716, 48
        %v718 = vpop.permute.xlu0 %717
        %v724 = vrot.slane %v389, 7
        %v725 = vsel %vm397, %v724, %v388
        %v726 = vrot.slane %v390, 6
        %v727 = vsel %vm400, %v726, %v725
        %v728 = vrot.slane %v391, 5
        %v729 = vsel %vm403, %v728, %v727
        %730 = vrot.lane.b32.xlu0 %v729, 56
        %v731 = vpop.permute.xlu0 %730
        %v733 = vsel %vm601, %v640, %v653
        %v734 = vsel %vm603, %v733, %v666
        %v735 = vsel %vm605, %v734, %v679
        %v736 = vsel %vm607, %v735, %v692
        %v737 = vsel %vm609, %v736, %v705
        %v738 = vsel %vm611, %v737, %v718
        %v739 = vsel %vm613, %v738, %v731
        %v741 = vperm.slane %v293, 0
        %v744 = vsel %vm615, %v739, 0
        %746 = vmatpush.msra.mxu0 %v284
        %747 = vmatpush.msra.mxu0 %v283
        %748 = vmatpush.msra.mxu0 %v282
        %749 = vmatpush.msra.mxu0 %v281
        %750 = vmatpush.msra.mxu0 %v280
        %751 = vmatpush.msra.mxu0 %v279
        %752 = vmatpush.msra.mxu0 %v278
        %753 = vmatpush.msra.mxu0 %v277
        %754 = vmatpush.msra.mxu0 %v276
        %755 = vmatpush.msra.mxu0 %v275
        %756 = vmatpush.msra.mxu0 %v274
        %757 = vmatpush.msra.mxu0 %v273
        %758 = vmatpush.msra.mxu0 %v272
        %759 = vmatpush.msra.mxu0 %v271
        %760 = vmatpush.msra.mxu0 %v270
        %761 = vmatpush.msra.mxu0 %v269
        %762 = vmatmul.f32.gmra.mxu0 %v630
        %v763 = vpop.f32.mrf.mxu0
        %v764 = vadd.f32 %v741, %v763
        %765 = vdwg.mxu0
        %766 = vmatpush.msra.mxu0 0.0
        %767 = vmatpush.msra.mxu0 0.0
        %768 = vmatpush.msra.mxu0 0.0
        %769 = vmatpush.msra.mxu0 0.0
        %770 = vmatpush.msra.mxu0 0.0
        %771 = vmatpush.msra.mxu0 0.0
        %772 = vmatpush.msra.mxu0 0.0
        %773 = vmatpush.msra.mxu0 0.0
        %774 = vmatpush.msra.mxu0 %v292
        %775 = vmatpush.msra.mxu0 %v291
        %776 = vmatpush.msra.mxu0 %v290
        %777 = vmatpush.msra.mxu0 %v289
        %778 = vmatpush.msra.mxu0 %v288
        %779 = vmatpush.msra.mxu0 %v287
        %780 = vmatpush.msra.mxu0 %v286
        %781 = vmatpush.msra.mxu0 %v285
        %782 = vmatmul.f32.gmra.mxu0 %v744
        %v783 = vpop.f32.mrf.mxu0
        %v784 = vadd.f32 %v764, %v783
        %785 = vdwg.mxu0
        %v787 = vrot.slane %v784, 1
        %v788 = vrot.slane %v784, 2
        %v789 = vrot.slane %v784, 3
        %vm793 = vcmask 253952
        %794 = vst.msk [vmem:[%s266] sm:$0x1] %vm793, %v784
        %795 = vst.msk [vmem:[%s266 + $0x2] sm:$0x1] %vm793, %v787
        %796 = vst.msk [vmem:[%s266 + $0x4] sm:$0x1] %vm793, %v788
        %797 = vst.msk [vmem:[%s266 + $0x6] sm:$0x1] %vm793, %v789
        %v798 = vld [vmem:[%s246] sm:$0x1]
        %v799 = vld [vmem:[%s246 + $0x18] sm:$0x1]
        %v800 = vld [vmem:[%s246 + $0x30] sm:$0x1]
        %v801 = vld [vmem:[%s246 + $0x48] sm:$0x1]
        %v802 = vld [vmem:[%s246 + $0x1] sm:$0x1]
        %v803 = vld [vmem:[%s246 + $0x19] sm:$0x1]
        %v804 = vld [vmem:[%s246 + $0x31] sm:$0x1]
        %v805 = vld [vmem:[%s246 + $0x49] sm:$0x1]
        %v806 = vld [vmem:[%s246 + $0x2] sm:$0x1]
        %v807 = vld [vmem:[%s246 + $0x1a] sm:$0x1]
        %v808 = vld [vmem:[%s246 + $0x32] sm:$0x1]
        %v809 = vld [vmem:[%s246 + $0x4a] sm:$0x1]
        %v810 = vld [vmem:[%s246 + $0x3] sm:$0x1]
        %v811 = vld [vmem:[%s246 + $0x1b] sm:$0x1]
        %v812 = vld [vmem:[%s246 + $0x33] sm:$0x1]
        %v813 = vld [vmem:[%s246 + $0x4b] sm:$0x1]
        %v814 = vld [vmem:[%s246 + $0x4] sm:$0x1]
        %v815 = vld [vmem:[%s246 + $0x1c] sm:$0x1]
        %v816 = vld [vmem:[%s246 + $0x34] sm:$0x1]
        %v817 = vld [vmem:[%s246 + $0x4c] sm:$0x1]
        %v818 = vld [vmem:[%s246 + $0x5] sm:$0x1]
        %v819 = vld [vmem:[%s246 + $0x1d] sm:$0x1]
        %v820 = vld [vmem:[%s246 + $0x35] sm:$0x1]
        %v821 = vld [vmem:[%s246 + $0x4d] sm:$0x1]
        %v822 = vld [vmem:[%s246 + $0x6] sm:$0x1]
        %v823 = vld [vmem:[%s246 + $0x1e] sm:$0x1]
        %v824 = vld [vmem:[%s246 + $0x36] sm:$0x1]
        %v825 = vld [vmem:[%s246 + $0x4e] sm:$0x1]
        %v826 = vld [vmem:[%s246 + $0x7] sm:$0x1]
        %v827 = vld [vmem:[%s246 + $0x1f] sm:$0x1]
        %v828 = vld [vmem:[%s246 + $0x37] sm:$0x1]
        %v829 = vld [vmem:[%s246 + $0x4f] sm:$0x1]
        %v830 = vld [vmem:[%s326] sm:$0x1]
        %v831 = vld [vmem:[%s326 + $0x18] sm:$0x1]
        %v832 = vld [vmem:[%s326 + $0x30] sm:$0x1]
        %v833 = vld [vmem:[%s326 + $0x48] sm:$0x1]
        %v834 = vld [vmem:[%s326 + $0x1] sm:$0x1]
        %v835 = vld [vmem:[%s326 + $0x19] sm:$0x1]
        %v836 = vld [vmem:[%s326 + $0x31] sm:$0x1]
        %v837 = vld [vmem:[%s326 + $0x49] sm:$0x1]
        %v838 = vld [vmem:[%s326 + $0x2] sm:$0x1]
        %v839 = vld [vmem:[%s326 + $0x1a] sm:$0x1]
        %v840 = vld [vmem:[%s326 + $0x32] sm:$0x1]
        %v841 = vld [vmem:[%s326 + $0x4a] sm:$0x1]
        %v842 = vld [vmem:[%s326 + $0x3] sm:$0x1]
        %v843 = vld [vmem:[%s326 + $0x1b] sm:$0x1]
        %v844 = vld [vmem:[%s326 + $0x33] sm:$0x1]
        %v845 = vld [vmem:[%s326 + $0x4b] sm:$0x1]
        %v846 = vld [vmem:[%s326 + $0x4] sm:$0x1]
        %v847 = vld [vmem:[%s326 + $0x1c] sm:$0x1]
        %v848 = vld [vmem:[%s326 + $0x34] sm:$0x1]
        %v849 = vld [vmem:[%s326 + $0x4c] sm:$0x1]
        %v850 = vld [vmem:[%s326 + $0x5] sm:$0x1]
        %v851 = vld [vmem:[%s326 + $0x1d] sm:$0x1]
        %v852 = vld [vmem:[%s326 + $0x35] sm:$0x1]
        %v853 = vld [vmem:[%s326 + $0x4d] sm:$0x1]
        %v854 = vld [vmem:[%s326 + $0x6] sm:$0x1]
        %v855 = vld [vmem:[%s326 + $0x1e] sm:$0x1]
        %v856 = vld [vmem:[%s326 + $0x36] sm:$0x1]
        %v857 = vld [vmem:[%s326 + $0x4e] sm:$0x1]
        %v858 = vld [vmem:[%s326 + $0x7] sm:$0x1]
        %v859 = vld [vmem:[%s326 + $0x1f] sm:$0x1]
        %v860 = vld [vmem:[%s326 + $0x37] sm:$0x1]
        %v861 = vld [vmem:[%s326 + $0x4f] sm:$0x1]
        %v862 = vld [vmem:[%s359] sm:$0x1]
        %v863 = vld [vmem:[%s359 + $0x18] sm:$0x1]
        %v864 = vld [vmem:[%s359 + $0x30] sm:$0x1]
        %v865 = vld [vmem:[%s359 + $0x48] sm:$0x1]
        %v866 = vld [vmem:[%s359 + $0x1] sm:$0x1]
        %v867 = vld [vmem:[%s359 + $0x19] sm:$0x1]
        %v868 = vld [vmem:[%s359 + $0x31] sm:$0x1]
        %v869 = vld [vmem:[%s359 + $0x49] sm:$0x1]
        %v870 = vld [vmem:[%s359 + $0x2] sm:$0x1]
        %v871 = vld [vmem:[%s359 + $0x1a] sm:$0x1]
        %v872 = vld [vmem:[%s359 + $0x32] sm:$0x1]
        %v873 = vld [vmem:[%s359 + $0x4a] sm:$0x1]
        %v874 = vld [vmem:[%s359 + $0x3] sm:$0x1]
        %v875 = vld [vmem:[%s359 + $0x1b] sm:$0x1]
        %v876 = vld [vmem:[%s359 + $0x33] sm:$0x1]
        %v877 = vld [vmem:[%s359 + $0x4b] sm:$0x1]
        %v878 = vld [vmem:[%s359 + $0x4] sm:$0x1]
        %v879 = vld [vmem:[%s359 + $0x1c] sm:$0x1]
        %v880 = vld [vmem:[%s359 + $0x34] sm:$0x1]
        %v881 = vld [vmem:[%s359 + $0x4c] sm:$0x1]
        %v882 = vld [vmem:[%s359 + $0x5] sm:$0x1]
        %v883 = vld [vmem:[%s359 + $0x1d] sm:$0x1]
        %v884 = vld [vmem:[%s359 + $0x35] sm:$0x1]
        %v885 = vld [vmem:[%s359 + $0x4d] sm:$0x1]
        %v886 = vld [vmem:[%s359 + $0x6] sm:$0x1]
        %v887 = vld [vmem:[%s359 + $0x1e] sm:$0x1]
        %v888 = vld [vmem:[%s359 + $0x36] sm:$0x1]
        %v889 = vld [vmem:[%s359 + $0x4e] sm:$0x1]
        %v890 = vld [vmem:[%s359 + $0x7] sm:$0x1]
        %v891 = vld [vmem:[%s359 + $0x1f] sm:$0x1]
        %v892 = vld [vmem:[%s359 + $0x37] sm:$0x1]
        %v893 = vld [vmem:[%s359 + $0x4f] sm:$0x1]
        %v898 = vrot.slane %v799, 7
        %v899 = vsel %vm397, %v898, %v798
        %v900 = vrot.slane %v800, 6
        %v901 = vsel %vm400, %v900, %v899
        %v902 = vrot.slane %v801, 5
        %v903 = vsel %vm403, %v902, %v901
        %904 = vrot.lane.b32.xlu0 %v903, 120
        %v905 = vpop.permute.xlu0 %904
        %v911 = vrot.slane %v803, 7
        %v912 = vsel %vm397, %v911, %v802
        %v913 = vrot.slane %v804, 6
        %v914 = vsel %vm400, %v913, %v912
        %v915 = vrot.slane %v805, 5
        %v916 = vsel %vm403, %v915, %v914
        %v922 = vrot.slane %v807, 7
        %v923 = vsel %vm397, %v922, %v806
        %v924 = vrot.slane %v808, 6
        %v925 = vsel %vm400, %v924, %v923
        %v926 = vrot.slane %v809, 5
        %v927 = vsel %vm403, %v926, %v925
        %928 = vrot.lane.b32.xlu0 %v927, 8
        %v929 = vpop.permute.xlu0 %928
        %v935 = vrot.slane %v811, 7
        %v936 = vsel %vm397, %v935, %v810
        %v937 = vrot.slane %v812, 6
        %v938 = vsel %vm400, %v937, %v936
        %v939 = vrot.slane %v813, 5
        %v940 = vsel %vm403, %v939, %v938
        %941 = vrot.lane.b32.xlu0 %v940, 16
        %v942 = vpop.permute.xlu0 %941
        %v948 = vrot.slane %v815, 7
        %v949 = vsel %vm397, %v948, %v814
        %v950 = vrot.slane %v816, 6
        %v951 = vsel %vm400, %v950, %v949
        %v952 = vrot.slane %v817, 5
        %v953 = vsel %vm403, %v952, %v951
        %954 = vrot.lane.b32.xlu0 %v953, 24
        %v955 = vpop.permute.xlu0 %954
        %v961 = vrot.slane %v819, 7
        %v962 = vsel %vm397, %v961, %v818
        %v963 = vrot.slane %v820, 6
        %v964 = vsel %vm400, %v963, %v962
        %v965 = vrot.slane %v821, 5
        %v966 = vsel %vm403, %v965, %v964
        %967 = vrot.lane.b32.xlu0 %v966, 32
        %v968 = vpop.permute.xlu0 %967
        %v974 = vrot.slane %v823, 7
        %v975 = vsel %vm397, %v974, %v822
        %v976 = vrot.slane %v824, 6
        %v977 = vsel %vm400, %v976, %v975
        %v978 = vrot.slane %v825, 5
        %v979 = vsel %vm403, %v978, %v977
        %980 = vrot.lane.b32.xlu0 %v979, 40
        %v981 = vpop.permute.xlu0 %980
        %v987 = vrot.slane %v827, 7
        %v988 = vsel %vm397, %v987, %v826
        %v989 = vrot.slane %v828, 6
        %v990 = vsel %vm400, %v989, %v988
        %v991 = vrot.slane %v829, 5
        %v992 = vsel %vm403, %v991, %v990
        %993 = vrot.lane.b32.xlu0 %v992, 48
        %v994 = vpop.permute.xlu0 %993
        %v1000 = vrot.slane %v831, 7
        %v1001 = vsel %vm397, %v1000, %v830
        %v1002 = vrot.slane %v832, 6
        %v1003 = vsel %vm400, %v1002, %v1001
        %v1004 = vrot.slane %v833, 5
        %v1005 = vsel %vm403, %v1004, %v1003
        %1006 = vrot.lane.b32.xlu0 %v1005, 56
        %v1007 = vpop.permute.xlu0 %1006
        %v1013 = vrot.slane %v835, 7
        %v1014 = vsel %vm397, %v1013, %v834
        %v1015 = vrot.slane %v836, 6
        %v1016 = vsel %vm400, %v1015, %v1014
        %v1017 = vrot.slane %v837, 5
        %v1018 = vsel %vm403, %v1017, %v1016
        %1019 = vrot.lane.b32.xlu0 %v1018, 64
        %v1020 = vpop.permute.xlu0 %1019
        %v1026 = vrot.slane %v839, 7
        %v1027 = vsel %vm397, %v1026, %v838
        %v1028 = vrot.slane %v840, 6
        %v1029 = vsel %vm400, %v1028, %v1027
        %v1030 = vrot.slane %v841, 5
        %v1031 = vsel %vm403, %v1030, %v1029
        %1032 = vrot.lane.b32.xlu0 %v1031, 72
        %v1033 = vpop.permute.xlu0 %1032
        %v1039 = vrot.slane %v843, 7
        %v1040 = vsel %vm397, %v1039, %v842
        %v1041 = vrot.slane %v844, 6
        %v1042 = vsel %vm400, %v1041, %v1040
        %v1043 = vrot.slane %v845, 5
        %v1044 = vsel %vm403, %v1043, %v1042
        %1045 = vrot.lane.b32.xlu0 %v1044, 80
        %v1046 = vpop.permute.xlu0 %1045
        %v1052 = vrot.slane %v847, 7
        %v1053 = vsel %vm397, %v1052, %v846
        %v1054 = vrot.slane %v848, 6
        %v1055 = vsel %vm400, %v1054, %v1053
        %v1056 = vrot.slane %v849, 5
        %v1057 = vsel %vm403, %v1056, %v1055
        %1058 = vrot.lane.b32.xlu0 %v1057, 88
        %v1059 = vpop.permute.xlu0 %1058
        %v1065 = vrot.slane %v851, 7
        %v1066 = vsel %vm397, %v1065, %v850
        %v1067 = vrot.slane %v852, 6
        %v1068 = vsel %vm400, %v1067, %v1066
        %v1069 = vrot.slane %v853, 5
        %v1070 = vsel %vm403, %v1069, %v1068
        %1071 = vrot.lane.b32.xlu0 %v1070, 96
        %v1072 = vpop.permute.xlu0 %1071
        %v1078 = vrot.slane %v855, 7
        %v1079 = vsel %vm397, %v1078, %v854
        %v1080 = vrot.slane %v856, 6
        %v1081 = vsel %vm400, %v1080, %v1079
        %v1082 = vrot.slane %v857, 5
        %v1083 = vsel %vm403, %v1082, %v1081
        %1084 = vrot.lane.b32.xlu0 %v1083, 104
        %v1085 = vpop.permute.xlu0 %1084
        %v1091 = vrot.slane %v859, 7
        %v1092 = vsel %vm397, %v1091, %v858
        %v1093 = vrot.slane %v860, 6
        %v1094 = vsel %vm400, %v1093, %v1092
        %v1095 = vrot.slane %v861, 5
        %v1096 = vsel %vm403, %v1095, %v1094
        %1097 = vrot.lane.b32.xlu0 %v1096, 112
        %v1098 = vpop.permute.xlu0 %1097
        %v1100 = vsel %vm601, %v905, %v916
        %v1101 = vsel %vm603, %v1100, %v929
        %v1102 = vsel %vm605, %v1101, %v942
        %v1103 = vsel %vm607, %v1102, %v955
        %v1104 = vsel %vm609, %v1103, %v968
        %v1105 = vsel %vm611, %v1104, %v981
        %v1106 = vsel %vm613, %v1105, %v994
        %v1107 = vsel %vm615, %v1106, %v1007
        %v1108 = vsel %vm617, %v1107, %v1020
        %v1109 = vsel %vm619, %v1108, %v1033
        %v1110 = vsel %vm621, %v1109, %v1046
        %v1111 = vsel %vm623, %v1110, %v1059
        %v1112 = vsel %vm625, %v1111, %v1072
        %v1113 = vsel %vm627, %v1112, %v1085
        %v1114 = vsel %vm629, %v1113, %v1098
        %v1119 = vrot.slane %v863, 7
        %v1120 = vsel %vm397, %v1119, %v862
        %v1121 = vrot.slane %v864, 6
        %v1122 = vsel %vm400, %v1121, %v1120
        %v1123 = vrot.slane %v865, 5
        %v1124 = vsel %vm403, %v1123, %v1122
        %1125 = vrot.lane.b32.xlu0 %v1124, 120
        %v1126 = vpop.permute.xlu0 %1125
        %v1132 = vrot.slane %v867, 7
        %v1133 = vsel %vm397, %v1132, %v866
        %v1134 = vrot.slane %v868, 6
        %v1135 = vsel %vm400, %v1134, %v1133
        %v1136 = vrot.slane %v869, 5
        %v1137 = vsel %vm403, %v1136, %v1135
        %v1143 = vrot.slane %v871, 7
        %v1144 = vsel %vm397, %v1143, %v870
        %v1145 = vrot.slane %v872, 6
        %v1146 = vsel %vm400, %v1145, %v1144
        %v1147 = vrot.slane %v873, 5
        %v1148 = vsel %vm403, %v1147, %v1146
        %1149 = vrot.lane.b32.xlu0 %v1148, 8
        %v1150 = vpop.permute.xlu0 %1149
        %v1156 = vrot.slane %v875, 7
        %v1157 = vsel %vm397, %v1156, %v874
        %v1158 = vrot.slane %v876, 6
        %v1159 = vsel %vm400, %v1158, %v1157
        %v1160 = vrot.slane %v877, 5
        %v1161 = vsel %vm403, %v1160, %v1159
        %1162 = vrot.lane.b32.xlu0 %v1161, 16
        %v1163 = vpop.permute.xlu0 %1162
        %v1169 = vrot.slane %v879, 7
        %v1170 = vsel %vm397, %v1169, %v878
        %v1171 = vrot.slane %v880, 6
        %v1172 = vsel %vm400, %v1171, %v1170
        %v1173 = vrot.slane %v881, 5
        %v1174 = vsel %vm403, %v1173, %v1172
        %1175 = vrot.lane.b32.xlu0 %v1174, 24
        %v1176 = vpop.permute.xlu0 %1175
        %v1182 = vrot.slane %v883, 7
        %v1183 = vsel %vm397, %v1182, %v882
        %v1184 = vrot.slane %v884, 6
        %v1185 = vsel %vm400, %v1184, %v1183
        %v1186 = vrot.slane %v885, 5
        %v1187 = vsel %vm403, %v1186, %v1185
        %1188 = vrot.lane.b32.xlu0 %v1187, 32
        %v1189 = vpop.permute.xlu0 %1188
        %v1195 = vrot.slane %v887, 7
        %v1196 = vsel %vm397, %v1195, %v886
        %v1197 = vrot.slane %v888, 6
        %v1198 = vsel %vm400, %v1197, %v1196
        %v1199 = vrot.slane %v889, 5
        %v1200 = vsel %vm403, %v1199, %v1198
        %1201 = vrot.lane.b32.xlu0 %v1200, 40
        %v1202 = vpop.permute.xlu0 %1201
        %v1208 = vrot.slane %v891, 7
        %v1209 = vsel %vm397, %v1208, %v890
        %v1210 = vrot.slane %v892, 6
        %v1211 = vsel %vm400, %v1210, %v1209
        %v1212 = vrot.slane %v893, 5
        %v1213 = vsel %vm403, %v1212, %v1211
        %1214 = vrot.lane.b32.xlu0 %v1213, 48
        %v1215 = vpop.permute.xlu0 %1214
        %v1217 = vsel %vm601, %v1126, %v1137
        %v1218 = vsel %vm603, %v1217, %v1150
        %v1219 = vsel %vm605, %v1218, %v1163
        %v1220 = vsel %vm607, %v1219, %v1176
        %v1221 = vsel %vm609, %v1220, %v1189
        %v1222 = vsel %vm611, %v1221, %v1202
        %v1223 = vsel %vm613, %v1222, %v1215
        %v1225 = vsel %vm615, %v1223, 0
        %1227 = vmatpush.msra.mxu0 %v284
        %1228 = vmatpush.msra.mxu0 %v283
        %1229 = vmatpush.msra.mxu0 %v282
        %1230 = vmatpush.msra.mxu0 %v281
        %1231 = vmatpush.msra.mxu0 %v280
        %1232 = vmatpush.msra.mxu0 %v279
        %1233 = vmatpush.msra.mxu0 %v278
        %1234 = vmatpush.msra.mxu0 %v277
        %1235 = vmatpush.msra.mxu0 %v276
        %1236 = vmatpush.msra.mxu0 %v275
        %1237 = vmatpush.msra.mxu0 %v274
        %1238 = vmatpush.msra.mxu0 %v273
        %1239 = vmatpush.msra.mxu0 %v272
        %1240 = vmatpush.msra.mxu0 %v271
        %1241 = vmatpush.msra.mxu0 %v270
        %1242 = vmatpush.msra.mxu0 %v269
        %1243 = vmatmul.f32.gmra.mxu0 %v1114
        %v1244 = vpop.f32.mrf.mxu0
        %v1245 = vadd.f32 %v741, %v1244
        %1246 = vdwg.mxu0
        %1247 = vmatpush.msra.mxu0 0.0
        %1248 = vmatpush.msra.mxu0 0.0
        %1249 = vmatpush.msra.mxu0 0.0
        %1250 = vmatpush.msra.mxu0 0.0
        %1251 = vmatpush.msra.mxu0 0.0
        %1252 = vmatpush.msra.mxu0 0.0
        %1253 = vmatpush.msra.mxu0 0.0
        %1254 = vmatpush.msra.mxu0 0.0
        %1255 = vmatpush.msra.mxu0 %v292
        %1256 = vmatpush.msra.mxu0 %v291
        %1257 = vmatpush.msra.mxu0 %v290
        %1258 = vmatpush.msra.mxu0 %v289
        %1259 = vmatpush.msra.mxu0 %v288
        %1260 = vmatpush.msra.mxu0 %v287
        %1261 = vmatpush.msra.mxu0 %v286
        %1262 = vmatpush.msra.mxu0 %v285
        %1263 = vmatmul.f32.gmra.mxu0 %v1225
        %v1264 = vpop.f32.mrf.mxu0
        %v1265 = vadd.f32 %v1245, %v1264
        %1266 = vdwg.mxu0
        %v1268 = vrot.slane %v1265, 1
        %v1269 = vrot.slane %v1265, 2
        %v1270 = vrot.slane %v1265, 3
        %1274 = vst.msk [vmem:[%s266 + $0x1] sm:$0x1] %vm793, %v1265
        %1275 = vst.msk [vmem:[%s266 + $0x3] sm:$0x1] %vm793, %v1268
        %1276 = vst.msk [vmem:[%s266 + $0x5] sm:$0x1] %vm793, %v1269
        %1277 = vst.msk [vmem:[%s266 + $0x7] sm:$0x1] %vm793, %v1270
        %s1278 = sand.u32 %s109, 1
        %s1279 = scalar_lea.sflag [#allocation4], %s1278
        %s1280 = sand.u32 %s109, 1
        %s1281 = smul.addr %s1280, 8
        %s1282 = scalar_lea.vmem [#allocation3], %s1281
        // Predicated region
        $region71: #{_fused_patch_embed.1} parent=65 // pred_check
          %p1283 = pneg %p119
        $region72: #{_fused_patch_embed.1} parent=65 // pred_check_branch
          %1285 = sbr.rel (%p1283) target = $region74
        $region73: #{_fused_patch_embed.1} parent=65 // pred_region
          %s1286 = smul.u32 4, %s21
          %1288 = vsyncadd %s1279, 0
          %s1289 = smul.addr %s1286, 2
          %s1290 = sadd.s32 %s22, %s1289
          %s1291 = smul.addr %s1290, 2
          %s1292 = scalar_lea.hbm %s3, %s1291
          %s1293 = sshll.u32 %s1282, 4
          %s1294 = int_to_ptr.vmem [resolvable:$true] %s1293
          %s1295 = sshll.u32 %s1292, 4
          %s1296 = int_to_ptr.hbm [resolvable:$true] %s1295
          %1301 = dma.vmem_to_hbm [thread:$0]  %s1294, 128, %s1296, %s1279, 32, 64, 2
        $region74: #{_fused_patch_embed.1} parent=65 // pred_fallthru
          _
      $region66: #{_fused_patch_embed.1} parent=5 // pred_fallthru
        _
      %p1302 = scmp.le.s32.totalorder 2, %s12
      // Predicated region
      $region75: #{_fused_patch_embed.1} parent=5 // pred_check
        %p1303 = pneg %p1302
      $region76: #{_fused_patch_embed.1} parent=5 // pred_check_branch
        %1305 = sbr.rel (%p1303) target = $region78
      $region77: #{_fused_patch_embed.1} parent=5 // pred_region
        %s1306 = ssub.s32 %s12, 2
        // Predicated region
        $region79: #{_fused_patch_embed.1} parent=77 // pred_check
          %p1307 = pneg %p125
        $region80: #{_fused_patch_embed.1} parent=77 // pred_check_branch
          %1309 = sbr.rel (%p1307) target = $region82
        $region81: #{_fused_patch_embed.1} parent=77 // pred_region
          %s1310 = sand.u32 %s110, 1
          %s1311 = scalar_lea.sflag [#allocation4], %s1310
          %s1312 = sand.u32 %s110, 1
          %s1313 = smul.addr %s1312, 8
          %s1314 = scalar_lea.vmem [#allocation3], %s1313
          %1316 = dma.done %s1311, 128
        $region82: #{_fused_patch_embed.1} parent=77 // pred_fallthru
          _
      $region78: #{_fused_patch_embed.1} parent=5 // pred_fallthru
        _
    $region6: #{_fused_patch_embed.1} parent=1 // loop_footer
      %s16 = sadd.s32 1, %s12
    $region7: #{_fused_patch_embed.1} parent=1 // loop_footer_branch
      %11 = sbr.rel target = $region3
    $region8: #{_fused_patch_embed.1} parent=1 // loop_exit
      _
    %1317 = vsyncpa [#allocation4], 1
    %s1318 = scalar_lea.sflag [#allocation4], 1
    %1319 = vsyncpa %s1318, 1

// kernel: _unfused_patch_embed.1
$region0: #{_unfused_patch_embed.1}
  #allocation0 [shape = 'u32[]', space=smem, size = 0x4, offset = 0x4, fixed_abs, tag = 'smem constant byte address 0x4 - core index']
  #allocation1 [shape = 'u32[72,128]{1,0:T(1,128)}', space=vmem, size = 0x9000, scoped, tag = 'internal scratch']
  %s0 = inlined_call_operand.vmem [shape: f32[16,192], index: 0, kind: input, shape index: {}]
  %s1 = inlined_call_operand.vmem [shape: f32[192,32], index: 1, kind: input, shape index: {}]
  %s2 = inlined_call_operand.vmem [shape: f32[1,32], index: 2, kind: input, shape index: {}]
  %s3 = inlined_call_operand.hbm [shape: f32[16,32], index: 3, kind: output, shape index: {}]
  %s4 = sld [smem:[#allocation0]]
  $region22: #{_unfused_patch_embed.1} parent=0
    _
  %s6 = ssub.s32 1, %s4
  %s7 = scalar_select 0, %s6, %s4
  $region1: #{_unfused_patch_embed.1} parent=0
    #allocation2 [shape = 'u8[8192]{0}', space=vmem, size = 0x2000, scoped, tag = 'output window, operand 0, single buffered']
    #allocation3 [shape = 's32[1]{0}', space=sflag, size = 0x4, scoped, tag = 'scoped memory for _unfused_patch_embed.1']
    %8 = vsyncpa [#allocation3], 0
    // Predicated region
    $region2: #{_unfused_patch_embed.1} parent=1 // pred_check
      _
    $region3: #{_unfused_patch_embed.1} parent=1 // pred_check_branch
      %10 = sbr.rel (0) target = $region5
    $region4: #{_unfused_patch_embed.1} parent=1 // pred_region
      _
    $region5: #{_unfused_patch_embed.1} parent=1 // pred_fallthru
      _
    // Predicated region
    $region6: #{_unfused_patch_embed.1} parent=1 // pred_check
      _
    $region7: #{_unfused_patch_embed.1} parent=1 // pred_check_branch
      %12 = sbr.rel (0) target = $region9
    $region8: #{_unfused_patch_embed.1} parent=1 // pred_region
      _
    $region9: #{_unfused_patch_embed.1} parent=1 // pred_fallthru
      _
    // Predicated region
    $region10: #{_unfused_patch_embed.1} parent=1 // pred_check
      _
    $region11: #{_unfused_patch_embed.1} parent=1 // pred_check_branch
      %14 = sbr.rel (0) target = $region13
    $region12: #{_unfused_patch_embed.1} parent=1 // pred_region
      _
    $region13: #{_unfused_patch_embed.1} parent=1 // pred_fallthru
      _
    %v15 = vld [vmem:[%s0] sm:$0xff]
    %v16 = vld [vmem:[%s0 + $0x8] sm:$0xff]
    %v17 = vld [vmem:[%s0 + $0x10] sm:$0xff]
    %v18 = vld [vmem:[%s0 + $0x18] sm:$0xff]
    %v19 = vld [vmem:[%s1] sm:$0xff]
    %v20 = vld [vmem:[%s1 + $0x8] sm:$0xff]
    %v21 = vld [vmem:[%s1 + $0x10] sm:$0xff]
    %v22 = vld [vmem:[%s1 + $0x18] sm:$0xff]
    %v23 = vld [vmem:[%s1 + $0x20] sm:$0xff]
    %v24 = vld [vmem:[%s1 + $0x28] sm:$0xff]
    %v25 = vld [vmem:[%s1 + $0x30] sm:$0xff]
    %v26 = vld [vmem:[%s1 + $0x38] sm:$0xff]
    %v27 = vld [vmem:[%s1 + $0x40] sm:$0xff]
    %v28 = vld [vmem:[%s1 + $0x48] sm:$0xff]
    %v29 = vld [vmem:[%s1 + $0x50] sm:$0xff]
    %v30 = vld [vmem:[%s1 + $0x58] sm:$0xff]
    %v31 = vld [vmem:[%s1 + $0x60] sm:$0xff]
    %v32 = vld [vmem:[%s1 + $0x68] sm:$0xff]
    %v33 = vld [vmem:[%s1 + $0x70] sm:$0xff]
    %v34 = vld [vmem:[%s1 + $0x78] sm:$0xff]
    %v35 = vld [vmem:[%s1 + $0x80] sm:$0xff]
    %v36 = vld [vmem:[%s1 + $0x88] sm:$0xff]
    %v37 = vld [vmem:[%s1 + $0x90] sm:$0xff]
    %v38 = vld [vmem:[%s1 + $0x98] sm:$0xff]
    %v39 = vld [vmem:[%s1 + $0xa0] sm:$0xff]
    %v40 = vld [vmem:[%s1 + $0xa8] sm:$0xff]
    %v41 = vld [vmem:[%s1 + $0xb0] sm:$0xff]
    %v42 = vld [vmem:[%s1 + $0xb8] sm:$0xff]
    %v43 = vld [vmem:[%s2] sm:$0x1]
    %v45 = vperm.slane %v43, 0
    %vm47 = vcmask 523264
    %v49 = vsel %vm47, %v16, 0
    %v52 = vsel %vm47, %v18, 0
    %54 = vmatpush.msra.mxu0 %v34
    %55 = vmatpush.msra.mxu0 %v33
    %56 = vmatpush.msra.mxu0 %v32
    %57 = vmatpush.msra.mxu0 %v31
    %58 = vmatpush.msra.mxu0 %v30
    %59 = vmatpush.msra.mxu0 %v29
    %60 = vmatpush.msra.mxu0 %v28
    %61 = vmatpush.msra.mxu0 %v27
    %62 = vmatpush.msra.mxu0 %v26
    %63 = vmatpush.msra.mxu0 %v25
    %64 = vmatpush.msra.mxu0 %v24
    %65 = vmatpush.msra.mxu0 %v23
    %66 = vmatpush.msra.mxu0 %v22
    %67 = vmatpush.msra.mxu0 %v21
    %68 = vmatpush.msra.mxu0 %v20
    %69 = vmatpush.msra.mxu0 %v19
    %70 = vmatmul.f32.gmra.mxu0 %v15
    %v71 = vpop.f32.mrf.mxu0
    %v72 = vadd.f32 %v45, %v71
    %73 = vmatmul.f32.gmra.mxu0 %v17
    %v74 = vpop.f32.mrf.mxu0
    %v75 = vadd.f32 %v45, %v74
    %76 = vdwg.mxu0
    %77 = vmatpush.msra.mxu0 0.0
    %78 = vmatpush.msra.mxu0 0.0
    %79 = vmatpush.msra.mxu0 0.0
    %80 = vmatpush.msra.mxu0 0.0
    %81 = vmatpush.msra.mxu0 0.0
    %82 = vmatpush.msra.mxu0 0.0
    %83 = vmatpush.msra.mxu0 0.0
    %84 = vmatpush.msra.mxu0 0.0
    %85 = vmatpush.msra.mxu0 %v42
    %86 = vmatpush.msra.mxu0 %v41
    %87 = vmatpush.msra.mxu0 %v40
    %88 = vmatpush.msra.mxu0 %v39
    %89 = vmatpush.msra.mxu0 %v38
    %90 = vmatpush.msra.mxu0 %v37
    %91 = vmatpush.msra.mxu0 %v36
    %92 = vmatpush.msra.mxu0 %v35
    %93 = vmatmul.f32.gmra.mxu0 %v49
    %v94 = vpop.f32.mrf.mxu0
    %v95 = vadd.f32 %v72, %v94
    %96 = vmatmul.f32.gmra.mxu0 %v52
    %v97 = vpop.f32.mrf.mxu0
    %v98 = vadd.f32 %v75, %v97
    %99 = vdwg.mxu0
    %vm100 = vcmask 261120
    %101 = vst.msk [vmem:[#allocation2] sm:$0xff] %vm100, %v95
    %102 = vst.msk [vmem:[#allocation2 + $0x8] sm:$0xff] %vm100, %v98
    // Predicated region
    $region14: #{_unfused_patch_embed.1} parent=1 // pred_check
      _
    $region15: #{_unfused_patch_embed.1} parent=1 // pred_check_branch
      %104 = sbr.rel (0) target = $region17
    $region16: #{_unfused_patch_embed.1} parent=1 // pred_region
      %106 = vsyncadd [#allocation3], 0
      %s107 = sshll.u32 [#allocation2], 4
      %s108 = int_to_ptr.vmem [resolvable:$true] %s107
      %s109 = sshll.u32 %s3, 4
      %s110 = int_to_ptr.hbm [resolvable:$true] %s109
      %115 = dma.vmem_to_hbm [thread:$0]  %s108, 256, %s110, [#allocation3], 128, 128, 8
    $region17: #{_unfused_patch_embed.1} parent=1 // pred_fallthru
      _
    // Predicated region
    $region18: #{_unfused_patch_embed.1} parent=1 // pred_check
      _
    $region19: #{_unfused_patch_embed.1} parent=1 // pred_check_branch
      %117 = sbr.rel (0) target = $region21
    $region20: #{_unfused_patch_embed.1} parent=1 // pred_region
      %119 = dma.done [#allocation3], 256
    $region21: #{_unfused_patch_embed.1} parent=1 // pred_fallthru
      _
    %120 = vsyncpa [#allocation3], 1

</llo_original>
